<compile_context>
chip_gen: v7x
topology: tpu7x:2x2x1
jax: 0.10.0
libtpu: 0.0.40
codegen_flags: <defaults>
</compile_context>

<pallas_src>
import functools

import jax
import jax.numpy as jnp
from jax import lax
from jax.experimental import pallas as pl
from jax.experimental.pallas import tpu as pltpu


def _layernorm(z, gamma, beta, eps=1e-5):
    mu = jnp.mean(z, axis=-1, keepdims=True)
    var = jnp.mean((z - mu) ** 2, axis=-1, keepdims=True)
    return (z - mu) * lax.rsqrt(var + eps) * gamma + beta


def _block_kernel(heads, head_dim, tq, n_q, n_valid,
                  x_ref,
                  wq_ref, wk_ref, wv_ref, wo_ref, bo_ref,
                  g1_ref, be1_ref,
                  w1_ref, bb1_ref, w2_ref, bb2_ref,
                  g2_ref, be2_ref,
                  o_ref,
                  k_scr, v_scr, oh_scr):
    f32 = jnp.float32
    bf16 = jnp.bfloat16
    n_pad = x_ref.shape[1]

    # ---- K/V for the whole (padded) sequence: computed ONCE per batch element ----
    # (q grid axis is "arbitrary", so this scratch legally carries across query tiles.)
    @pl.when(pl.program_id(1) == 0)
    def _():
        xk = x_ref[0].astype(bf16)                                     # (Np, E)
        k_scr[...] = jnp.dot(xk, wk_ref[...],
                             preferred_element_type=f32).astype(bf16)  # dense block-diag
        v_scr[...] = jnp.dot(xk, wv_ref[...],
                             preferred_element_type=f32).astype(bf16)

    # ---- query rows handled by this grid step ----
    if n_q == 1:
        xq = x_ref[0]                                                  # (tq, E) f32
    else:
        qstart = pl.multiple_of(pl.program_id(1) * tq, tq)
        xq = x_ref[0, pl.ds(qstart, tq), :]

    # Dense block-diagonal Q projection; softmax 1/sqrt(E) scale is folded into wq.
    q_all = jnp.dot(xq.astype(bf16), wq_ref[...],
                    preferred_element_type=f32).astype(bf16)           # (tq, E)
    k_all = k_scr[...]                                                 # (Np, E) bf16
    v_all = v_scr[...]

    # ---- per-head scores / softmax / P@V, heads assembled along lanes in scratch ----
    # Static unroll: head_dim < 128 forbids dynamic lane offsets; per-head live state is
    # now only the (tq, Np) score tile (projections / fc_out are dense, outside the loop).
    for h in range(heads):
        lo = h * head_dim
        hi = lo + head_dim
        qh = q_all[:, lo:hi]                                           # (tq, hd) bf16
        kh = k_all[:, lo:hi]                                           # (Np, hd) bf16
        vh = v_all[:, lo:hi]
        # QK^T without an explicit transpose: contract the head dims directly.
        e = lax.dot_general(qh, kh,
                            dimension_numbers=(((1,), (1,)), ((), ())),
                            preferred_element_type=f32)                # (tq, Np)
        if n_valid < n_pad:                                            # static: mask padded keys
            kmask = lax.broadcasted_iota(jnp.int32, e.shape, 1) < n_valid
            e = jnp.where(kmask, e, -1e30)
        e = e - jnp.max(e, axis=-1, keepdims=True)
        p = jnp.exp(e)
        denom = jnp.sum(p, axis=-1, keepdims=True)                     # (tq, 1)
        oh = jnp.dot(p.astype(bf16), vh, preferred_element_type=f32)   # (tq, hd)
        oh_scr[:, lo:hi] = oh * pl.reciprocal(denom, approx=True)      # deferred softmax norm

    # Single dense fc_out matmul over the assembled (tq, E) head outputs.
    attn = jnp.dot(oh_scr[...].astype(bf16), wo_ref[...],
                   preferred_element_type=f32) + bo_ref[...]

    # ---- residual 1: norm1(x) + attn ----
    x1 = _layernorm(xq, g1_ref[...], be1_ref[...]) + attn

    # ---- feed-forward: Linear(E,4E) -> ReLU -> Linear(4E,E) (bf16 MXU, f32 acc) ----
    h1 = jnp.dot(x1.astype(bf16), w1_ref[...], preferred_element_type=f32) + bb1_ref[...]
    h1 = jnp.maximum(h1, 0.0)
    ff = jnp.dot(h1.astype(bf16), w2_ref[...], preferred_element_type=f32) + bb2_ref[...]

    # ---- residual 2: norm2(FF(x1) + x1) ----
    out = _layernorm(ff + x1, g2_ref[...], be2_ref[...])
    o_ref[0] = out.astype(o_ref.dtype)


def seq_transformer_block(x, params, heads, q_tile=256):
    """x: (B, N, E) float32. params: dict of pre-transposed kernel weights.

    q_tile: 256-512 recommended on v5e/v6e (128 MiB VMEM), 128 on v7x (64 MiB VMEM).
    """
    B, N, E = x.shape
    head_dim = E // heads
    assert heads * head_dim == E

    # --- query tiling: pad the sequence so the q grid divides evenly (padded keys are
    #     masked inside the kernel); keep everything sublane (8) aligned ---
    n_round = ((N + 7) // 8) * 8
    tq = max(8, (min(q_tile, n_round) // 8) * 8)
    n_q = -(-N // tq)
    N_pad = n_q * tq
    if N_pad != N:
        x = jnp.pad(x, ((0, 0), (0, N_pad - N), (0, 0)))

    # bf16 weights for the MXU (f32 accumulation in-kernel). Q/K/V become dense
    # block-diagonal (E,E) matrices (kron(I_heads, W)) so each projection is one
    # full-contraction matmul; the 1/sqrt(E) softmax scale is folded into Wq.
    scale = 1.0 / jnp.sqrt(jnp.float32(E))
    bf16 = jnp.bfloat16
    eye = jnp.eye(heads, dtype=jnp.float32)
    wq = jnp.kron(eye, params["wq"] * scale).astype(bf16)
    wk = jnp.kron(eye, params["wk"]).astype(bf16)
    wv = jnp.kron(eye, params["wv"]).astype(bf16)
    wo = params["wo"].astype(bf16)
    w1 = params["w1"].astype(bf16)
    w2 = params["w2"].astype(bf16)

    const2d = lambda shape: pl.BlockSpec(shape, lambda b, q: (0, 0))
    in_specs = [
        pl.BlockSpec((1, N_pad, E), lambda b, q: (b, 0, 0)),          # x: full sequence, resident across q
        const2d((E, E)), const2d((E, E)), const2d((E, E)),            # wq (scaled), wk, wv (block-diag dense)
        const2d((E, E)), const2d((1, E)),                             # wo, bo
        const2d((1, E)), const2d((1, E)),                             # ln1 gamma, beta
        const2d((E, 4 * E)), const2d((1, 4 * E)),                     # ff1 w, b
        const2d((4 * E, E)), const2d((1, E)),                         # ff2 w, b
        const2d((1, E)), const2d((1, E)),                             # ln2 gamma, beta
    ]

    # --- VMEM budget sized from actual buffers (+16 MiB headroom), clamped for v7x ---
    wbytes = 12 * E * E * 2                       # bf16 weights: 3 QKV + fc_out + FF(8*E*E)
    bbytes = 10 * E * 4                           # f32 biases / LN params
    xbytes = N_pad * E * 4                        # resident f32 x block
    obytes = tq * E * 4                           # output block
    sbytes = 2 * N_pad * E * 2 + tq * E * 4       # K/V bf16 scratch + head-assembly f32
    vmem_limit = int(min(64 << 20,
                         max(32 << 20,
                             2 * (wbytes + bbytes + xbytes + obytes) + sbytes + (16 << 20))))

    # Advisory cost estimate so XLA schedules around the custom call sensibly.
    flops = int(B * N_pad * 24 * E * E            # dense QKV (6) + fc_out (2) + FF (16)
                + 4 * B * N_pad * N_pad * E)      # QK^T and P@V over all heads
    transcendentals = int(B * heads * N_pad * N_pad)
    bytes_accessed = int(2 * B * N_pad * E * 4 + wbytes + bbytes)

    kernel = functools.partial(_block_kernel, heads, head_dim, tq, n_q, N)
    out = pl.pallas_call(
        kernel,
        out_shape=jax.ShapeDtypeStruct((B, N_pad, E), x.dtype),
        grid_spec=pltpu.PrefetchScalarGridSpec(
            num_scalar_prefetch=0,
            grid=(B, n_q),
            in_specs=in_specs,
            out_specs=pl.BlockSpec((1, tq, E), lambda b, q: (b, q, 0)),
            scratch_shapes=[pltpu.VMEM((N_pad, E), bf16),          # K (whole sequence)
                            pltpu.VMEM((N_pad, E), bf16),          # V (whole sequence)
                            pltpu.VMEM((tq, E), jnp.float32)]),    # assembled head outputs
        compiler_params=pltpu.CompilerParams(
            # q axis carries the per-batch K/V scratch -> must be "arbitrary".
            dimension_semantics=("parallel", "arbitrary"),
            vmem_limit_bytes=vmem_limit),
        cost_estimate=pl.CostEstimate(flops=flops,
                                      transcendentals=transcendentals,
                                      bytes_accessed=bytes_accessed),
    )(x, wq, wk, wv, wo, params["bo"],
      params["g1"], params["be1"],
      w1, params["bb1"], w2, params["bb2"],
      params["g2"], params["be2"])

    if N_pad != N:
        out = out[:, :N, :]
    return out


def init_params(key, embed, heads, expand=4):
    head_dim = embed // heads
    ks = jax.random.split(key, 8)
    s = 0.05
    # Per-head Linear(head_dim, head_dim, bias=False), weights shared across heads.
    Wq = jax.random.normal(ks[0], (head_dim, head_dim), jnp.float32) * s
    Wk = jax.random.normal(ks[1], (head_dim, head_dim), jnp.float32) * s
    Wv = jax.random.normal(ks[2], (head_dim, head_dim), jnp.float32) * s
    Wo = jax.random.normal(ks[3], (embed, embed), jnp.float32) * s            # fc_out
    bo = jax.random.normal(ks[4], (1, embed), jnp.float32) * s
    W1 = jax.random.normal(ks[5], (expand * embed, embed), jnp.float32) * s
    b1 = jax.random.normal(ks[6], (1, expand * embed), jnp.float32) * s
    W2 = jax.random.normal(ks[7], (embed, expand * embed), jnp.float32) * s
    b2 = jnp.zeros((1, embed), jnp.float32)
    return {
        "wq": Wq.T, "wk": Wk.T, "wv": Wv.T,          # y = x_h @ W.T
        "wo": Wo.T, "bo": bo,
        "g1": jnp.ones((1, embed), jnp.float32), "be1": jnp.zeros((1, embed), jnp.float32),
        "w1": W1.T, "bb1": b1, "w2": W2.T, "bb2": b2,
        "g2": jnp.ones((1, embed), jnp.float32), "be2": jnp.zeros((1, embed), jnp.float32),
    }


def reference(x, p, heads):
    """Pure-JAX f32 reference for a correctness check."""
    B, N, E = x.shape
    hd = E // heads
    xh = x.reshape(B, N, heads, hd)
    q = xh @ p["wq"]
    k = xh @ p["wk"]
    v = xh @ p["wv"]
    e = jnp.einsum("bqhd,bkhd->bhqk", q, k) / jnp.sqrt(jnp.float32(E))
    a = jax.nn.softmax(e, axis=-1)
    attn = jnp.einsum("bhqk,bkhd->bqhd", a, v).reshape(B, N, E) @ p["wo"] + p["bo"]
    ln = lambda z, g, b: (z - z.mean(-1, keepdims=True)) * lax.rsqrt(
        ((z - z.mean(-1, keepdims=True)) ** 2).mean(-1, keepdims=True) + 1e-5) * g + b
    x1 = ln(x, p["g1"], p["be1"]) + attn
    h1 = jnp.maximum(x1 @ p["w1"] + p["bb1"], 0.0)
    ff = h1 @ p["w2"] + p["bb2"]
    return ln(ff + x1, p["g2"], p["be2"])


if __name__ == "__main__":
    B, N, E, HEADS = 2, 8, 32, 4
    key = jax.random.PRNGKey(0)
    kx, kp = jax.random.split(key)
    x = jax.random.normal(kx, (B, N, E), jnp.float32)
    params = init_params(kp, E, HEADS)

    out = jax.block_until_ready(seq_transformer_block(x, params, HEADS))
    ref = jax.block_until_ready(reference(x, params, HEADS))

    assert out.shape == (B, N, E)
    # bf16 MXU matmuls (f32 accumulation) vs. pure-f32 reference -> relaxed tolerance.
    assert jnp.allclose(out, ref, atol=2e-2, rtol=2e-2), "mismatch vs JAX reference"
    print("KERNEL_OK")
</pallas_src>

<mosaic_0001>
module attributes {stable_mosaic.version = 11 : i64} {
  func.func @_block_kernel(%arg0: i32, %arg1: i32, %arg2: memref<1x8x32xf32, #tpu.memory_space<vmem>>, %arg3: memref<32x32xbf16, #tpu.memory_space<vmem>>, %arg4: memref<32x32xbf16, #tpu.memory_space<vmem>>, %arg5: memref<32x32xbf16, #tpu.memory_space<vmem>>, %arg6: memref<32x32xbf16, #tpu.memory_space<vmem>>, %arg7: memref<1x32xf32, #tpu.memory_space<vmem>>, %arg8: memref<1x32xf32, #tpu.memory_space<vmem>>, %arg9: memref<1x32xf32, #tpu.memory_space<vmem>>, %arg10: memref<32x128xbf16, #tpu.memory_space<vmem>>, %arg11: memref<1x128xf32, #tpu.memory_space<vmem>>, %arg12: memref<128x32xbf16, #tpu.memory_space<vmem>>, %arg13: memref<1x32xf32, #tpu.memory_space<vmem>>, %arg14: memref<1x32xf32, #tpu.memory_space<vmem>>, %arg15: memref<1x32xf32, #tpu.memory_space<vmem>>, %arg16: memref<1x8x32xf32, #tpu.memory_space<vmem>>, %arg17: memref<8x32xbf16, #tpu.memory_space<vmem>>, %arg18: memref<8x32xbf16, #tpu.memory_space<vmem>>, %arg19: memref<8x32xf32, #tpu.memory_space<vmem>>) attributes {dimension_semantics = [#tpu.dimension_semantics<parallel>, #tpu.dimension_semantics<arbitrary>], iteration_bounds = array<i64: 2, 1>, scalar_prefetch = 0 : i64, scratch_operands = 3 : i64, tpu.core_type = #tpu.core_type<tc>, window_params = [{transform_indices = @transform_0, window_bounds = array<i64: 1, 8, 32>}, {pipeline_mode = #tpu.pipeline_mode<synchronous>, transform_indices = @transform_1, window_bounds = array<i64: 32, 32>}, {pipeline_mode = #tpu.pipeline_mode<synchronous>, transform_indices = @transform_2, window_bounds = array<i64: 32, 32>}, {pipeline_mode = #tpu.pipeline_mode<synchronous>, transform_indices = @transform_3, window_bounds = array<i64: 32, 32>}, {pipeline_mode = #tpu.pipeline_mode<synchronous>, transform_indices = @transform_4, window_bounds = array<i64: 32, 32>}, {pipeline_mode = #tpu.pipeline_mode<synchronous>, transform_indices = @transform_5, window_bounds = array<i64: 1, 32>}, {pipeline_mode = #tpu.pipeline_mode<synchronous>, transform_indices = @transform_6, window_bounds = array<i64: 1, 32>}, {pipeline_mode = #tpu.pipeline_mode<synchronous>, transform_indices = @transform_7, window_bounds = array<i64: 1, 32>}, {pipeline_mode = #tpu.pipeline_mode<synchronous>, transform_indices = @transform_8, window_bounds = array<i64: 32, 128>}, {pipeline_mode = #tpu.pipeline_mode<synchronous>, transform_indices = @transform_9, window_bounds = array<i64: 1, 128>}, {pipeline_mode = #tpu.pipeline_mode<synchronous>, transform_indices = @transform_10, window_bounds = array<i64: 128, 32>}, {pipeline_mode = #tpu.pipeline_mode<synchronous>, transform_indices = @transform_11, window_bounds = array<i64: 1, 32>}, {pipeline_mode = #tpu.pipeline_mode<synchronous>, transform_indices = @transform_12, window_bounds = array<i64: 1, 32>}, {pipeline_mode = #tpu.pipeline_mode<synchronous>, transform_indices = @transform_13, window_bounds = array<i64: 1, 32>}, {transform_indices = @transform_14, window_bounds = array<i64: 1, 8, 32>}]} {
    %c0_i32 = arith.constant 0 : i32
    %0 = arith.cmpi eq, %arg1, %c0_i32 : i32
    %1 = arith.extui %0 : i1 to i32
    %c0_i32_0 = arith.constant 0 : i32
    %2 = arith.cmpi ne, %1, %c0_i32_0 : i32
    scf.if %2 {
      %c0_69 = arith.constant 0 : index
      %c0_70 = arith.constant 0 : index
      %c0_71 = arith.constant 0 : index
      %153 = vector.load %arg2[%c0_69, %c0_70, %c0_71] : memref<1x8x32xf32, #tpu.memory_space<vmem>>, vector<1x8x32xf32>
      %154 = vector.shape_cast %153 : vector<1x8x32xf32> to vector<8x32xf32>
      %155 = arith.truncf %154 : vector<8x32xf32> to vector<8x32xbf16>
      %c0_72 = arith.constant 0 : index
      %c0_73 = arith.constant 0 : index
      %156 = vector.load %arg4[%c0_72, %c0_73] : memref<32x32xbf16, #tpu.memory_space<vmem>>, vector<32x32xbf16>
      %cst_74 = arith.constant dense<0.000000e+00> : vector<8x32xf32>
      %157 = tpu.matmul %155, %156, %cst_74 {dimension_numbers = #tpu.dot_dimension_numbers<[1], [0], [0], [1], [0, 0, 1, 1], [], []>} : vector<8x32xbf16>, vector<32x32xbf16>, vector<8x32xf32> -> vector<8x32xf32>
      %158 = arith.truncf %157 : vector<8x32xf32> to vector<8x32xbf16>
      %c0_75 = arith.constant 0 : index
      %c0_76 = arith.constant 0 : index
      %159 = vector.load %arg17[%c0_75, %c0_76] : memref<8x32xbf16, #tpu.memory_space<vmem>>, vector<8x32xbf16>
      tpu.vector_store %arg17[%c0_75, %c0_76], %158 {strides = array<i32>} : memref<8x32xbf16, #tpu.memory_space<vmem>>, vector<8x32xbf16>,
      %c0_77 = arith.constant 0 : index
      %c0_78 = arith.constant 0 : index
      %160 = vector.load %arg5[%c0_77, %c0_78] : memref<32x32xbf16, #tpu.memory_space<vmem>>, vector<32x32xbf16>
      %cst_79 = arith.constant dense<0.000000e+00> : vector<8x32xf32>
      %161 = tpu.matmul %155, %160, %cst_79 {dimension_numbers = #tpu.dot_dimension_numbers<[1], [0], [0], [1], [0, 0, 1, 1], [], []>} : vector<8x32xbf16>, vector<32x32xbf16>, vector<8x32xf32> -> vector<8x32xf32>
      %162 = arith.truncf %161 : vector<8x32xf32> to vector<8x32xbf16>
      %c0_80 = arith.constant 0 : index
      %c0_81 = arith.constant 0 : index
      %163 = vector.load %arg18[%c0_80, %c0_81] : memref<8x32xbf16, #tpu.memory_space<vmem>>, vector<8x32xbf16>
      tpu.vector_store %arg18[%c0_80, %c0_81], %162 {strides = array<i32>} : memref<8x32xbf16, #tpu.memory_space<vmem>>, vector<8x32xbf16>,
    } else {
    }
    %c0 = arith.constant 0 : index
    %c0_1 = arith.constant 0 : index
    %c0_2 = arith.constant 0 : index
    %3 = vector.load %arg2[%c0, %c0_1, %c0_2] : memref<1x8x32xf32, #tpu.memory_space<vmem>>, vector<1x8x32xf32>
    %4 = vector.shape_cast %3 : vector<1x8x32xf32> to vector<8x32xf32>
    %5 = arith.truncf %4 : vector<8x32xf32> to vector<8x32xbf16>
    %c0_3 = arith.constant 0 : index
    %c0_4 = arith.constant 0 : index
    %6 = vector.load %arg3[%c0_3, %c0_4] : memref<32x32xbf16, #tpu.memory_space<vmem>>, vector<32x32xbf16>
    %cst = arith.constant dense<0.000000e+00> : vector<8x32xf32>
    %7 = tpu.matmul %5, %6, %cst {dimension_numbers = #tpu.dot_dimension_numbers<[1], [0], [0], [1], [0, 0, 1, 1], [], []>} : vector<8x32xbf16>, vector<32x32xbf16>, vector<8x32xf32> -> vector<8x32xf32>
    %8 = arith.truncf %7 : vector<8x32xf32> to vector<8x32xbf16>
    %c0_5 = arith.constant 0 : index
    %c0_6 = arith.constant 0 : index
    %9 = vector.load %arg17[%c0_5, %c0_6] : memref<8x32xbf16, #tpu.memory_space<vmem>>, vector<8x32xbf16>
    %c0_7 = arith.constant 0 : index
    %c0_8 = arith.constant 0 : index
    %10 = vector.load %arg18[%c0_7, %c0_8] : memref<8x32xbf16, #tpu.memory_space<vmem>>, vector<8x32xbf16>
    %11 = vector.extract_strided_slice %8 {offsets = [0, 0], sizes = [8, 8], strides = [1, 1]} : vector<8x32xbf16> to vector<8x8xbf16>
    %12 = vector.extract_strided_slice %9 {offsets = [0, 0], sizes = [8, 8], strides = [1, 1]} : vector<8x32xbf16> to vector<8x8xbf16>
    %13 = vector.extract_strided_slice %10 {offsets = [0, 0], sizes = [8, 8], strides = [1, 1]} : vector<8x32xbf16> to vector<8x8xbf16>
    %cst_9 = arith.constant dense<0.000000e+00> : vector<8x8xf32>
    %14 = tpu.matmul %11, %12, %cst_9 {dimension_numbers = #tpu.dot_dimension_numbers<[1], [1], [0], [0], [0, 0, 1, 0], [], []>} : vector<8x8xbf16>, vector<8x8xbf16>, vector<8x8xf32> -> vector<8x8xf32>
    %cst_10 = arith.constant dense<0xFF800000> : vector<8xf32>
    %15 = vector.multi_reduction <maximumf>, %14, %cst_10 [1] : vector<8x8xf32> to vector<8xf32>
    %16 = vector.shape_cast %15 : vector<8xf32> to vector<8x1xf32>
    %17 = vector.broadcast %16 : vector<8x1xf32> to vector<8x8xf32>
    %18 = arith.subf %14, %17 : vector<8x8xf32>
    %19 = math.exp %18 : vector<8x8xf32>
    %cst_11 = arith.constant dense<0.000000e+00> : vector<8xf32>
    %20 = vector.multi_reduction <add>, %19, %cst_11 [1] : vector<8x8xf32> to vector<8xf32>
    %21 = vector.shape_cast %20 : vector<8xf32> to vector<8x1xf32>
    %22 = arith.truncf %19 : vector<8x8xf32> to vector<8x8xbf16>
    %cst_12 = arith.constant dense<0.000000e+00> : vector<8x8xf32>
    %23 = tpu.matmul %22, %13, %cst_12 {dimension_numbers = #tpu.dot_dimension_numbers<[1], [0], [0], [1], [0, 0, 1, 1], [], []>} : vector<8x8xbf16>, vector<8x8xbf16>, vector<8x8xf32> -> vector<8x8xf32>
    %24 = tpu.reciprocal %21 {approx = true} : vector<8x1xf32> -> vector<8x1xf32>
    %25 = vector.broadcast %24 : vector<8x1xf32> to vector<8x8xf32>
    %26 = arith.mulf %23, %25 : vector<8x8xf32>
    %c0_13 = arith.constant 0 : index
    %c0_14 = arith.constant 0 : index
    %27 = vector.load %arg19[%c0_13, %c0_14] : memref<8x32xf32, #tpu.memory_space<vmem>>, vector<8x8xf32>
    tpu.vector_store %arg19[%c0_13, %c0_14], %26 {strides = array<i32>} : memref<8x32xf32, #tpu.memory_space<vmem>>, vector<8x8xf32>,
    %28 = vector.extract_strided_slice %8 {offsets = [0, 8], sizes = [8, 8], strides = [1, 1]} : vector<8x32xbf16> to vector<8x8xbf16>
    %29 = vector.extract_strided_slice %9 {offsets = [0, 8], sizes = [8, 8], strides = [1, 1]} : vector<8x32xbf16> to vector<8x8xbf16>
    %30 = vector.extract_strided_slice %10 {offsets = [0, 8], sizes = [8, 8], strides = [1, 1]} : vector<8x32xbf16> to vector<8x8xbf16>
    %cst_15 = arith.constant dense<0.000000e+00> : vector<8x8xf32>
    %31 = tpu.matmul %28, %29, %cst_15 {dimension_numbers = #tpu.dot_dimension_numbers<[1], [1], [0], [0], [0, 0, 1, 0], [], []>} : vector<8x8xbf16>, vector<8x8xbf16>, vector<8x8xf32> -> vector<8x8xf32>
    %cst_16 = arith.constant dense<0xFF800000> : vector<8xf32>
    %32 = vector.multi_reduction <maximumf>, %31, %cst_16 [1] : vector<8x8xf32> to vector<8xf32>
    %33 = vector.shape_cast %32 : vector<8xf32> to vector<8x1xf32>
    %34 = vector.broadcast %33 : vector<8x1xf32> to vector<8x8xf32>
    %35 = arith.subf %31, %34 : vector<8x8xf32>
    %36 = math.exp %35 : vector<8x8xf32>
    %cst_17 = arith.constant dense<0.000000e+00> : vector<8xf32>
    %37 = vector.multi_reduction <add>, %36, %cst_17 [1] : vector<8x8xf32> to vector<8xf32>
    %38 = vector.shape_cast %37 : vector<8xf32> to vector<8x1xf32>
    %39 = arith.truncf %36 : vector<8x8xf32> to vector<8x8xbf16>
    %cst_18 = arith.constant dense<0.000000e+00> : vector<8x8xf32>
    %40 = tpu.matmul %39, %30, %cst_18 {dimension_numbers = #tpu.dot_dimension_numbers<[1], [0], [0], [1], [0, 0, 1, 1], [], []>} : vector<8x8xbf16>, vector<8x8xbf16>, vector<8x8xf32> -> vector<8x8xf32>
    %41 = tpu.reciprocal %38 {approx = true} : vector<8x1xf32> -> vector<8x1xf32>
    %42 = vector.broadcast %41 : vector<8x1xf32> to vector<8x8xf32>
    %43 = arith.mulf %40, %42 : vector<8x8xf32>
    %c0_19 = arith.constant 0 : index
    %c8 = arith.constant 8 : index
    %44 = vector.load %arg19[%c0_19, %c8] : memref<8x32xf32, #tpu.memory_space<vmem>>, vector<8x8xf32>
    tpu.vector_store %arg19[%c0_19, %c8], %43 {strides = array<i32>} : memref<8x32xf32, #tpu.memory_space<vmem>>, vector<8x8xf32>,
    %45 = vector.extract_strided_slice %8 {offsets = [0, 16], sizes = [8, 8], strides = [1, 1]} : vector<8x32xbf16> to vector<8x8xbf16>
    %46 = vector.extract_strided_slice %9 {offsets = [0, 16], sizes = [8, 8], strides = [1, 1]} : vector<8x32xbf16> to vector<8x8xbf16>
    %47 = vector.extract_strided_slice %10 {offsets = [0, 16], sizes = [8, 8], strides = [1, 1]} : vector<8x32xbf16> to vector<8x8xbf16>
    %cst_20 = arith.constant dense<0.000000e+00> : vector<8x8xf32>
    %48 = tpu.matmul %45, %46, %cst_20 {dimension_numbers = #tpu.dot_dimension_numbers<[1], [1], [0], [0], [0, 0, 1, 0], [], []>} : vector<8x8xbf16>, vector<8x8xbf16>, vector<8x8xf32> -> vector<8x8xf32>
    %cst_21 = arith.constant dense<0xFF800000> : vector<8xf32>
    %49 = vector.multi_reduction <maximumf>, %48, %cst_21 [1] : vector<8x8xf32> to vector<8xf32>
    %50 = vector.shape_cast %49 : vector<8xf32> to vector<8x1xf32>
    %51 = vector.broadcast %50 : vector<8x1xf32> to vector<8x8xf32>
    %52 = arith.subf %48, %51 : vector<8x8xf32>
    %53 = math.exp %52 : vector<8x8xf32>
    %cst_22 = arith.constant dense<0.000000e+00> : vector<8xf32>
    %54 = vector.multi_reduction <add>, %53, %cst_22 [1] : vector<8x8xf32> to vector<8xf32>
    %55 = vector.shape_cast %54 : vector<8xf32> to vector<8x1xf32>
    %56 = arith.truncf %53 : vector<8x8xf32> to vector<8x8xbf16>
    %cst_23 = arith.constant dense<0.000000e+00> : vector<8x8xf32>
    %57 = tpu.matmul %56, %47, %cst_23 {dimension_numbers = #tpu.dot_dimension_numbers<[1], [0], [0], [1], [0, 0, 1, 1], [], []>} : vector<8x8xbf16>, vector<8x8xbf16>, vector<8x8xf32> -> vector<8x8xf32>
    %58 = tpu.reciprocal %55 {approx = true} : vector<8x1xf32> -> vector<8x1xf32>
    %59 = vector.broadcast %58 : vector<8x1xf32> to vector<8x8xf32>
    %60 = arith.mulf %57, %59 : vector<8x8xf32>
    %c0_24 = arith.constant 0 : index
    %c16 = arith.constant 16 : index
    %61 = vector.load %arg19[%c0_24, %c16] : memref<8x32xf32, #tpu.memory_space<vmem>>, vector<8x8xf32>
    tpu.vector_store %arg19[%c0_24, %c16], %60 {strides = array<i32>} : memref<8x32xf32, #tpu.memory_space<vmem>>, vector<8x8xf32>,
    %62 = vector.extract_strided_slice %8 {offsets = [0, 24], sizes = [8, 8], strides = [1, 1]} : vector<8x32xbf16> to vector<8x8xbf16>
    %63 = vector.extract_strided_slice %9 {offsets = [0, 24], sizes = [8, 8], strides = [1, 1]} : vector<8x32xbf16> to vector<8x8xbf16>
    %64 = vector.extract_strided_slice %10 {offsets = [0, 24], sizes = [8, 8], strides = [1, 1]} : vector<8x32xbf16> to vector<8x8xbf16>
    %cst_25 = arith.constant dense<0.000000e+00> : vector<8x8xf32>
    %65 = tpu.matmul %62, %63, %cst_25 {dimension_numbers = #tpu.dot_dimension_numbers<[1], [1], [0], [0], [0, 0, 1, 0], [], []>} : vector<8x8xbf16>, vector<8x8xbf16>, vector<8x8xf32> -> vector<8x8xf32>
    %cst_26 = arith.constant dense<0xFF800000> : vector<8xf32>
    %66 = vector.multi_reduction <maximumf>, %65, %cst_26 [1] : vector<8x8xf32> to vector<8xf32>
    %67 = vector.shape_cast %66 : vector<8xf32> to vector<8x1xf32>
    %68 = vector.broadcast %67 : vector<8x1xf32> to vector<8x8xf32>
    %69 = arith.subf %65, %68 : vector<8x8xf32>
    %70 = math.exp %69 : vector<8x8xf32>
    %cst_27 = arith.constant dense<0.000000e+00> : vector<8xf32>
    %71 = vector.multi_reduction <add>, %70, %cst_27 [1] : vector<8x8xf32> to vector<8xf32>
    %72 = vector.shape_cast %71 : vector<8xf32> to vector<8x1xf32>
    %73 = arith.truncf %70 : vector<8x8xf32> to vector<8x8xbf16>
    %cst_28 = arith.constant dense<0.000000e+00> : vector<8x8xf32>
    %74 = tpu.matmul %73, %64, %cst_28 {dimension_numbers = #tpu.dot_dimension_numbers<[1], [0], [0], [1], [0, 0, 1, 1], [], []>} : vector<8x8xbf16>, vector<8x8xbf16>, vector<8x8xf32> -> vector<8x8xf32>
    %75 = tpu.reciprocal %72 {approx = true} : vector<8x1xf32> -> vector<8x1xf32>
    %76 = vector.broadcast %75 : vector<8x1xf32> to vector<8x8xf32>
    %77 = arith.mulf %74, %76 : vector<8x8xf32>
    %c0_29 = arith.constant 0 : index
    %c24 = arith.constant 24 : index
    %78 = vector.load %arg19[%c0_29, %c24] : memref<8x32xf32, #tpu.memory_space<vmem>>, vector<8x8xf32>
    tpu.vector_store %arg19[%c0_29, %c24], %77 {strides = array<i32>} : memref<8x32xf32, #tpu.memory_space<vmem>>, vector<8x8xf32>,
    %c0_30 = arith.constant 0 : index
    %c0_31 = arith.constant 0 : index
    %79 = vector.load %arg19[%c0_30, %c0_31] : memref<8x32xf32, #tpu.memory_space<vmem>>, vector<8x32xf32>
    %80 = arith.truncf %79 : vector<8x32xf32> to vector<8x32xbf16>
    %c0_32 = arith.constant 0 : index
    %c0_33 = arith.constant 0 : index
    %81 = vector.load %arg6[%c0_32, %c0_33] : memref<32x32xbf16, #tpu.memory_space<vmem>>, vector<32x32xbf16>
    %cst_34 = arith.constant dense<0.000000e+00> : vector<8x32xf32>
    %82 = tpu.matmul %80, %81, %cst_34 {dimension_numbers = #tpu.dot_dimension_numbers<[1], [0], [0], [1], [0, 0, 1, 1], [], []>} : vector<8x32xbf16>, vector<32x32xbf16>, vector<8x32xf32> -> vector<8x32xf32>
    %c0_35 = arith.constant 0 : index
    %c0_36 = arith.constant 0 : index
    %83 = vector.load %arg7[%c0_35, %c0_36] : memref<1x32xf32, #tpu.memory_space<vmem>>, vector<1x32xf32>
    %84 = vector.broadcast %83 : vector<1x32xf32> to vector<8x32xf32>
    %85 = arith.addf %82, %84 : vector<8x32xf32>
    %c0_37 = arith.constant 0 : index
    %c0_38 = arith.constant 0 : index
    %86 = vector.load %arg8[%c0_37, %c0_38] : memref<1x32xf32, #tpu.memory_space<vmem>>, vector<1x32xf32>
    %c0_39 = arith.constant 0 : index
    %c0_40 = arith.constant 0 : index
    %87 = vector.load %arg9[%c0_39, %c0_40] : memref<1x32xf32, #tpu.memory_space<vmem>>, vector<1x32xf32>
    %cst_41 = arith.constant dense<0.000000e+00> : vector<8xf32>
    %88 = vector.multi_reduction <add>, %4, %cst_41 [1] : vector<8x32xf32> to vector<8xf32>
    %89 = vector.shape_cast %88 : vector<8xf32> to vector<8x1xf32>
    %cst_42 = arith.constant 3.200000e+01 : f32
    %90 = vector.broadcast %cst_42 : f32 to vector<8x1xf32>
    %91 = arith.divf %89, %90 : vector<8x1xf32>
    %92 = vector.broadcast %91 : vector<8x1xf32> to vector<8x32xf32>
    %93 = arith.subf %4, %92 : vector<8x32xf32>
    %94 = arith.mulf %93, %93 : vector<8x32xf32>
    %cst_43 = arith.constant dense<0.000000e+00> : vector<8xf32>
    %95 = vector.multi_reduction <add>, %94, %cst_43 [1] : vector<8x32xf32> to vector<8xf32>
    %96 = vector.shape_cast %95 : vector<8xf32> to vector<8x1xf32>
    %cst_44 = arith.constant 3.200000e+01 : f32
    %97 = vector.broadcast %cst_44 : f32 to vector<8x1xf32>
    %98 = arith.divf %96, %97 : vector<8x1xf32>
    %99 = vector.broadcast %91 : vector<8x1xf32> to vector<8x32xf32>
    %100 = arith.subf %4, %99 : vector<8x32xf32>
    %cst_45 = arith.constant 9.99999974E-6 : f32
    %101 = vector.broadcast %cst_45 : f32 to vector<8x1xf32>
    %102 = arith.addf %98, %101 : vector<8x1xf32>
    %103 = math.rsqrt %102 : vector<8x1xf32>
    %104 = vector.broadcast %103 : vector<8x1xf32> to vector<8x32xf32>
    %105 = arith.mulf %100, %104 : vector<8x32xf32>
    %106 = vector.broadcast %86 : vector<1x32xf32> to vector<8x32xf32>
    %107 = arith.mulf %105, %106 : vector<8x32xf32>
    %108 = vector.broadcast %87 : vector<1x32xf32> to vector<8x32xf32>
    %109 = arith.addf %107, %108 : vector<8x32xf32>
    %110 = arith.addf %109, %85 : vector<8x32xf32>
    %111 = arith.truncf %110 : vector<8x32xf32> to vector<8x32xbf16>
    %c0_46 = arith.constant 0 : index
    %c0_47 = arith.constant 0 : index
    %112 = vector.load %arg10[%c0_46, %c0_47] : memref<32x128xbf16, #tpu.memory_space<vmem>>, vector<32x128xbf16>
    %cst_48 = arith.constant dense<0.000000e+00> : vector<8x128xf32>
    %113 = tpu.matmul %111, %112, %cst_48 {dimension_numbers = #tpu.dot_dimension_numbers<[1], [0], [0], [1], [0, 0, 1, 1], [], []>} : vector<8x32xbf16>, vector<32x128xbf16>, vector<8x128xf32> -> vector<8x128xf32>
    %c0_49 = arith.constant 0 : index
    %c0_50 = arith.constant 0 : index
    %114 = vector.load %arg11[%c0_49, %c0_50] : memref<1x128xf32, #tpu.memory_space<vmem>>, vector<1x128xf32>
    %115 = vector.broadcast %114 : vector<1x128xf32> to vector<8x128xf32>
    %116 = arith.addf %113, %115 : vector<8x128xf32>
    %cst_51 = arith.constant 0.000000e+00 : f32
    %117 = vector.broadcast %cst_51 : f32 to vector<8x128xf32>
    %118 = arith.maximumf %116, %117 : vector<8x128xf32>
    %119 = arith.truncf %118 : vector<8x128xf32> to vector<8x128xbf16>
    %c0_52 = arith.constant 0 : index
    %c0_53 = arith.constant 0 : index
    %120 = vector.load %arg12[%c0_52, %c0_53] : memref<128x32xbf16, #tpu.memory_space<vmem>>, vector<128x32xbf16>
    %cst_54 = arith.constant dense<0.000000e+00> : vector<8x32xf32>
    %121 = tpu.matmul %119, %120, %cst_54 {dimension_numbers = #tpu.dot_dimension_numbers<[1], [0], [0], [1], [0, 0, 1, 1], [], []>} : vector<8x128xbf16>, vector<128x32xbf16>, vector<8x32xf32> -> vector<8x32xf32>
    %c0_55 = arith.constant 0 : index
    %c0_56 = arith.constant 0 : index
    %122 = vector.load %arg13[%c0_55, %c0_56] : memref<1x32xf32, #tpu.memory_space<vmem>>, vector<1x32xf32>
    %123 = vector.broadcast %122 : vector<1x32xf32> to vector<8x32xf32>
    %124 = arith.addf %121, %123 : vector<8x32xf32>
    %125 = arith.addf %124, %110 : vector<8x32xf32>
    %c0_57 = arith.constant 0 : index
    %c0_58 = arith.constant 0 : index
    %126 = vector.load %arg14[%c0_57, %c0_58] : memref<1x32xf32, #tpu.memory_space<vmem>>, vector<1x32xf32>
    %c0_59 = arith.constant 0 : index
    %c0_60 = arith.constant 0 : index
    %127 = vector.load %arg15[%c0_59, %c0_60] : memref<1x32xf32, #tpu.memory_space<vmem>>, vector<1x32xf32>
    %cst_61 = arith.constant dense<0.000000e+00> : vector<8xf32>
    %128 = vector.multi_reduction <add>, %125, %cst_61 [1] : vector<8x32xf32> to vector<8xf32>
    %129 = vector.shape_cast %128 : vector<8xf32> to vector<8x1xf32>
    %cst_62 = arith.constant 3.200000e+01 : f32
    %130 = vector.broadcast %cst_62 : f32 to vector<8x1xf32>
    %131 = arith.divf %129, %130 : vector<8x1xf32>
    %132 = vector.broadcast %131 : vector<8x1xf32> to vector<8x32xf32>
    %133 = arith.subf %125, %132 : vector<8x32xf32>
    %134 = arith.mulf %133, %133 : vector<8x32xf32>
    %cst_63 = arith.constant dense<0.000000e+00> : vector<8xf32>
    %135 = vector.multi_reduction <add>, %134, %cst_63 [1] : vector<8x32xf32> to vector<8xf32>
    %136 = vector.shape_cast %135 : vector<8xf32> to vector<8x1xf32>
    %cst_64 = arith.constant 3.200000e+01 : f32
    %137 = vector.broadcast %cst_64 : f32 to vector<8x1xf32>
    %138 = arith.divf %136, %137 : vector<8x1xf32>
    %139 = vector.broadcast %131 : vector<8x1xf32> to vector<8x32xf32>
    %140 = arith.subf %125, %139 : vector<8x32xf32>
    %cst_65 = arith.constant 9.99999974E-6 : f32
    %141 = vector.broadcast %cst_65 : f32 to vector<8x1xf32>
    %142 = arith.addf %138, %141 : vector<8x1xf32>
    %143 = math.rsqrt %142 : vector<8x1xf32>
    %144 = vector.broadcast %143 : vector<8x1xf32> to vector<8x32xf32>
    %145 = arith.mulf %140, %144 : vector<8x32xf32>
    %146 = vector.broadcast %126 : vector<1x32xf32> to vector<8x32xf32>
    %147 = arith.mulf %145, %146 : vector<8x32xf32>
    %148 = vector.broadcast %127 : vector<1x32xf32> to vector<8x32xf32>
    %149 = arith.addf %147, %148 : vector<8x32xf32>
    %c0_66 = arith.constant 0 : index
    %c0_67 = arith.constant 0 : index
    %c0_68 = arith.constant 0 : index
    %150 = vector.load %arg16[%c0_66, %c0_67, %c0_68] : memref<1x8x32xf32, #tpu.memory_space<vmem>>, vector<1x8x32xf32>
    %151 = vector.shape_cast %150 : vector<1x8x32xf32> to vector<8x32xf32>
    %152 = vector.shape_cast %149 : vector<8x32xf32> to vector<1x8x32xf32>
    tpu.vector_store %arg16[%c0_66, %c0_67, %c0_68], %152 {strides = array<i32>} : memref<1x8x32xf32, #tpu.memory_space<vmem>>, vector<1x8x32xf32>,
    return
  }
  func.func @transform_0(%arg0: i32, %arg1: i32) -> (i32, i32, i32) {
    %c0_i32 = arith.constant 0 : i32
    %c0_i32_0 = arith.constant 0 : i32
    %c0_i32_1 = arith.constant 0 : i32
    return %arg0, %c0_i32, %c0_i32_0 : i32, i32, i32
  }
  func.func @transform_1(%arg0: i32, %arg1: i32) -> (i32, i32) {
    %c0_i32 = arith.constant 0 : i32
    %c0_i32_0 = arith.constant 0 : i32
    %c0_i32_1 = arith.constant 0 : i32
    return %c0_i32, %c0_i32_0 : i32, i32
  }
  func.func @transform_2(%arg0: i32, %arg1: i32) -> (i32, i32) {
    %c0_i32 = arith.constant 0 : i32
    %c0_i32_0 = arith.constant 0 : i32
    %c0_i32_1 = arith.constant 0 : i32
    return %c0_i32, %c0_i32_0 : i32, i32
  }
  func.func @transform_3(%arg0: i32, %arg1: i32) -> (i32, i32) {
    %c0_i32 = arith.constant 0 : i32
    %c0_i32_0 = arith.constant 0 : i32
    %c0_i32_1 = arith.constant 0 : i32
    return %c0_i32, %c0_i32_0 : i32, i32
  }
  func.func @transform_4(%arg0: i32, %arg1: i32) -> (i32, i32) {
    %c0_i32 = arith.constant 0 : i32
    %c0_i32_0 = arith.constant 0 : i32
    %c0_i32_1 = arith.constant 0 : i32
    return %c0_i32, %c0_i32_0 : i32, i32
  }
  func.func @transform_5(%arg0: i32, %arg1: i32) -> (i32, i32) {
    %c0_i32 = arith.constant 0 : i32
    %c0_i32_0 = arith.constant 0 : i32
    %c0_i32_1 = arith.constant 0 : i32
    return %c0_i32, %c0_i32_0 : i32, i32
  }
  func.func @transform_6(%arg0: i32, %arg1: i32) -> (i32, i32) {
    %c0_i32 = arith.constant 0 : i32
    %c0_i32_0 = arith.constant 0 : i32
    %c0_i32_1 = arith.constant 0 : i32
    return %c0_i32, %c0_i32_0 : i32, i32
  }
  func.func @transform_7(%arg0: i32, %arg1: i32) -> (i32, i32) {
    %c0_i32 = arith.constant 0 : i32
    %c0_i32_0 = arith.constant 0 : i32
    %c0_i32_1 = arith.constant 0 : i32
    return %c0_i32, %c0_i32_0 : i32, i32
  }
  func.func @transform_8(%arg0: i32, %arg1: i32) -> (i32, i32) {
    %c0_i32 = arith.constant 0 : i32
    %c0_i32_0 = arith.constant 0 : i32
    %c0_i32_1 = arith.constant 0 : i32
    return %c0_i32, %c0_i32_0 : i32, i32
  }
  func.func @transform_9(%arg0: i32, %arg1: i32) -> (i32, i32) {
    %c0_i32 = arith.constant 0 : i32
    %c0_i32_0 = arith.constant 0 : i32
    %c0_i32_1 = arith.constant 0 : i32
    return %c0_i32, %c0_i32_0 : i32, i32
  }
  func.func @transform_10(%arg0: i32, %arg1: i32) -> (i32, i32) {
    %c0_i32 = arith.constant 0 : i32
    %c0_i32_0 = arith.constant 0 : i32
    %c0_i32_1 = arith.constant 0 : i32
    return %c0_i32, %c0_i32_0 : i32, i32
  }
  func.func @transform_11(%arg0: i32, %arg1: i32) -> (i32, i32) {
    %c0_i32 = arith.constant 0 : i32
    %c0_i32_0 = arith.constant 0 : i32
    %c0_i32_1 = arith.constant 0 : i32
    return %c0_i32, %c0_i32_0 : i32, i32
  }
  func.func @transform_12(%arg0: i32, %arg1: i32) -> (i32, i32) {
    %c0_i32 = arith.constant 0 : i32
    %c0_i32_0 = arith.constant 0 : i32
    %c0_i32_1 = arith.constant 0 : i32
    return %c0_i32, %c0_i32_0 : i32, i32
  }
  func.func @transform_13(%arg0: i32, %arg1: i32) -> (i32, i32) {
    %c0_i32 = arith.constant 0 : i32
    %c0_i32_0 = arith.constant 0 : i32
    %c0_i32_1 = arith.constant 0 : i32
    return %c0_i32, %c0_i32_0 : i32, i32
  }
  func.func @transform_14(%arg0: i32, %arg1: i32) -> (i32, i32, i32) {
    %c0_i32 = arith.constant 0 : i32
    %c0_i32_0 = arith.constant 0 : i32
    return %arg0, %arg1, %c0_i32 : i32, i32, i32
  }
}

</mosaic_0001>

<llo_original>
// kernel: tpu_custom_call.1
$region0: #{tpu_custom_call.1}
  #allocation0 [shape = 'u32[]', space=smem, size = 0x4, offset = 0x4, fixed_abs, tag = 'smem constant byte address 0x4 - core index']
  #allocation1 [shape = 'u32[144,128]{1,0:T(1,128)}', space=vmem, size = 0x12000, scoped, tag = 'internal scratch']
  #allocation2 [shape = 'bf16[8,32]{1,0:T(8,128)(2,1)}', space=vmem, size = 0x800, scoped, tag = 'scratch operand']
  #allocation3 [shape = 'bf16[8,32]{1,0:T(8,128)(2,1)}', space=vmem, size = 0x800, scoped, tag = 'scratch operand']
  #allocation4 [shape = 'f32[8,32]{1,0:T(8,128)}', space=vmem, size = 0x1000, scoped, tag = 'scratch operand']
  %s0 = inlined_call_operand.vmem [shape: f32[2,8,32], index: 0, kind: input, shape index: {}]
  %s1 = inlined_call_operand.vmem [shape: bf16[32,32], index: 1, kind: input, shape index: {}]
  %s2 = inlined_call_operand.vmem [shape: bf16[32,32], index: 2, kind: input, shape index: {}]
  %s3 = inlined_call_operand.vmem [shape: bf16[32,32], index: 3, kind: input, shape index: {}]
  %s4 = inlined_call_operand.vmem [shape: bf16[32,32], index: 4, kind: input, shape index: {}]
  %s5 = inlined_call_operand.vmem [shape: f32[1,32], index: 5, kind: input, shape index: {}]
  %s6 = inlined_call_operand.vmem [shape: f32[1,32], index: 6, kind: input, shape index: {}]
  %s7 = inlined_call_operand.vmem [shape: f32[1,32], index: 7, kind: input, shape index: {}]
  %s8 = inlined_call_operand.hbm [shape: bf16[32,128], index: 8, kind: input, shape index: {}]
  %s9 = inlined_call_operand.vmem [shape: f32[1,128], index: 9, kind: input, shape index: {}]
  %s10 = inlined_call_operand.vmem [shape: bf16[128,32], index: 10, kind: input, shape index: {}]
  %s11 = inlined_call_operand.vmem [shape: f32[1,32], index: 11, kind: input, shape index: {}]
  %s12 = inlined_call_operand.vmem [shape: f32[1,32], index: 12, kind: input, shape index: {}]
  %s13 = inlined_call_operand.vmem [shape: f32[1,32], index: 13, kind: input, shape index: {}]
  %s14 = inlined_call_operand.hbm [shape: f32[2,8,32], index: 14, kind: output, shape index: {}]
  %s15 = sld [smem:[#allocation0]]
  $region97: #{tpu_custom_call.1} parent=0
    _
  %s17 = ssub.s32 1, %s15
  %s18 = scalar_select 0, %s17, %s15
  $region1: #{tpu_custom_call.1} parent=0
    #allocation5 [shape = 'u8[8192]{0}', space=vmem, size = 0x2000, scoped, tag = 'input window, operand 8, single buffered']
    #allocation6 [shape = 's32[2]{0}', space=sflag, size = 0x8, scoped, tag = 'scoped memory for tpu_custom_call.1']
    #allocation7 [shape = 's32[2]{0}', space=sflag, size = 0x8, scoped, tag = 'scoped memory for tpu_custom_call.1']
    #allocation8 [shape = 'u8[8192]{0}', space=vmem, size = 0x2000, scoped, tag = 'output window, operand 0']
    %19 = vsyncpa [#allocation6], 0
    %20 = vsyncpa [#allocation7], 0
    %s21 = scalar_lea.sflag [#allocation7], 1
    %22 = vsyncpa %s21, 0
    loop: start=0, step=1, limit=4
    $region2: #{tpu_custom_call.1} parent=1 // loop_pre_header
      _
    $region3: #{tpu_custom_call.1} parent=1 // loop_header
      %s24 = sphi 0, %s28
      %p25 = scmp.ge.s32.totalorder %s24, 4
      %s31 = sphi 0, %s43
      %s32 = sphi 0, %s39
      %s33 = sphi 0, %s31
      %s34 = sphi 0, %s32
      %s35 = sphi 0, %s33
      %s36 = sphi 0, %s34
      %s46 = sphi 0, %s48
      %s49 = sphi 0, %s46
      %s50 = sphi 0, %s49
      %s66 = sphi 0, %s50
      %s70 = sphi 0, %s70
      %s72 = sphi 0, %s70
      %s73 = sphi 0, %s72
      %s87 = sphi 0, %s73
      %s91 = sphi 0, %s91
      %s93 = sphi 0, %s91
      %s94 = sphi 0, %s93
      %s108 = sphi 0, %s94
      %s112 = sphi 0, %s112
      %s114 = sphi 0, %s112
      %s115 = sphi 0, %s114
      %s129 = sphi 0, %s115
      %s133 = sphi 0, %s133
      %s135 = sphi 0, %s133
      %s136 = sphi 0, %s135
      %s150 = sphi 0, %s136
      %s154 = sphi 0, %s154
      %s156 = sphi 0, %s154
      %s157 = sphi 0, %s156
      %s171 = sphi 0, %s157
      %s175 = sphi 0, %s175
      %s177 = sphi 0, %s175
      %s178 = sphi 0, %s177
      %s192 = sphi 0, %s178
      %s196 = sphi 0, %s196
      %s198 = sphi 0, %s196
      %s199 = sphi 0, %s198
      %s213 = sphi 0, %s199
      %s217 = sphi 0, %s217
      %s219 = sphi 0, %s217
      %s220 = sphi 0, %s219
      %s234 = sphi 0, %s220
      %s238 = sphi 0, %s238
      %s240 = sphi 0, %s238
      %s241 = sphi 0, %s240
      %s255 = sphi 0, %s241
      %s259 = sphi 0, %s259
      %s261 = sphi 0, %s259
      %s262 = sphi 0, %s261
      %s276 = sphi 0, %s262
      %s280 = sphi 0, %s280
      %s282 = sphi 0, %s280
      %s283 = sphi 0, %s282
      %s297 = sphi 0, %s283
      %s301 = sphi 0, %s301
      %s303 = sphi 0, %s301
      %s304 = sphi 0, %s303
      %s318 = sphi 0, %s304
      %s322 = sphi 0, %s322
      %s324 = sphi 0, %s322
      %s325 = sphi 0, %s324
      %s339 = sphi 0, %s325
      %s347 = sphi 0, %s349
      %s350 = sphi 0, %s347
      %s351 = sphi 0, %s350
      %s367 = sphi 0, %s351
    $region4: #{tpu_custom_call.1} parent=1 // loop_header_branch
      %27 = sbr.rel (%p25) target = $region8
    $region5: #{tpu_custom_call.1} parent=1 // loop_body
      %s29 = ssub.s32 %s24, 1
      %s30 = ssub.s32 %s24, 2
      %s37 = sadd.s32 1, %s32
      %p38 = scmp.ge.s32.totalorder %s37, 1
      %s39 = scalar_select %p38, 0, %s37
      %s40 = sadd.s32 1, %s31
      %s41 = scalar_select %p38, %s40, %s31
      %p42 = scmp.ge.s32.totalorder %s41, 2
      %s43 = scalar_select %p42, 0, %s41
      %s44 = ssub.s32 %s31, %s43
      %p45 = scmp.eq.s32.totalorder %s44, 0
      %s47 = sadd.s32 %s46, 1
      %s48 = scalar_select %p45, %s46, %s47
      %p51 = pneg %p45
      %p52 = scmp.eq.s32.totalorder %s24, 1
      %p53 = por %p51, %p52
      %p54 = scmp.ne.s32.totalorder %s46, %s49
      %p55 = scmp.eq.s32.totalorder %s24, 0
      %p56 = por %p54, %p55
      %p57 = scmp.ne.s32.totalorder %s46, %s49
      %p58 = scmp.eq.s32.totalorder %s29, 1
      %p59 = por %p57, %p58
      %p60 = scmp.ne.s32.totalorder %s49, %s50
      %p61 = scmp.eq.s32.totalorder %s29, 0
      %p62 = por %p60, %p61
      %p63 = scmp.ne.s32.totalorder %s49, %s50
      %p64 = scmp.eq.s32.totalorder %s30, 1
      %p65 = por %p63, %p64
      %p67 = scmp.ne.s32.totalorder %s50, %s66
      %p68 = scmp.eq.s32.totalorder %s30, 0
      %p69 = por %p67, %p68
      %s71 = sadd.s32 %s70, 1
      %p74 = scmp.eq.s32.totalorder %s24, 1
      %p75 = scmp.ne.s32.totalorder %s70, %s72
      %p76 = scmp.eq.s32.totalorder %s24, 0
      %p77 = por %p75, %p76
      %p78 = scmp.ne.s32.totalorder %s70, %s72
      %p79 = scmp.eq.s32.totalorder %s29, 1
      %p80 = por %p78, %p79
      %p81 = scmp.ne.s32.totalorder %s72, %s73
      %p82 = scmp.eq.s32.totalorder %s29, 0
      %p83 = por %p81, %p82
      %p84 = scmp.ne.s32.totalorder %s72, %s73
      %p85 = scmp.eq.s32.totalorder %s30, 1
      %p86 = por %p84, %p85
      %p88 = scmp.ne.s32.totalorder %s73, %s87
      %p89 = scmp.eq.s32.totalorder %s30, 0
      %p90 = por %p88, %p89
      %s92 = sadd.s32 %s91, 1
      %p95 = scmp.eq.s32.totalorder %s24, 1
      %p96 = scmp.ne.s32.totalorder %s91, %s93
      %p97 = scmp.eq.s32.totalorder %s24, 0
      %p98 = por %p96, %p97
      %p99 = scmp.ne.s32.totalorder %s91, %s93
      %p100 = scmp.eq.s32.totalorder %s29, 1
      %p101 = por %p99, %p100
      %p102 = scmp.ne.s32.totalorder %s93, %s94
      %p103 = scmp.eq.s32.totalorder %s29, 0
      %p104 = por %p102, %p103
      %p105 = scmp.ne.s32.totalorder %s93, %s94
      %p106 = scmp.eq.s32.totalorder %s30, 1
      %p107 = por %p105, %p106
      %p109 = scmp.ne.s32.totalorder %s94, %s108
      %p110 = scmp.eq.s32.totalorder %s30, 0
      %p111 = por %p109, %p110
      %s113 = sadd.s32 %s112, 1
      %p116 = scmp.eq.s32.totalorder %s24, 1
      %p117 = scmp.ne.s32.totalorder %s112, %s114
      %p118 = scmp.eq.s32.totalorder %s24, 0
      %p119 = por %p117, %p118
      %p120 = scmp.ne.s32.totalorder %s112, %s114
      %p121 = scmp.eq.s32.totalorder %s29, 1
      %p122 = por %p120, %p121
      %p123 = scmp.ne.s32.totalorder %s114, %s115
      %p124 = scmp.eq.s32.totalorder %s29, 0
      %p125 = por %p123, %p124
      %p126 = scmp.ne.s32.totalorder %s114, %s115
      %p127 = scmp.eq.s32.totalorder %s30, 1
      %p128 = por %p126, %p127
      %p130 = scmp.ne.s32.totalorder %s115, %s129
      %p131 = scmp.eq.s32.totalorder %s30, 0
      %p132 = por %p130, %p131
      %s134 = sadd.s32 %s133, 1
      %p137 = scmp.eq.s32.totalorder %s24, 1
      %p138 = scmp.ne.s32.totalorder %s133, %s135
      %p139 = scmp.eq.s32.totalorder %s24, 0
      %p140 = por %p138, %p139
      %p141 = scmp.ne.s32.totalorder %s133, %s135
      %p142 = scmp.eq.s32.totalorder %s29, 1
      %p143 = por %p141, %p142
      %p144 = scmp.ne.s32.totalorder %s135, %s136
      %p145 = scmp.eq.s32.totalorder %s29, 0
      %p146 = por %p144, %p145
      %p147 = scmp.ne.s32.totalorder %s135, %s136
      %p148 = scmp.eq.s32.totalorder %s30, 1
      %p149 = por %p147, %p148
      %p151 = scmp.ne.s32.totalorder %s136, %s150
      %p152 = scmp.eq.s32.totalorder %s30, 0
      %p153 = por %p151, %p152
      %s155 = sadd.s32 %s154, 1
      %p158 = scmp.eq.s32.totalorder %s24, 1
      %p159 = scmp.ne.s32.totalorder %s154, %s156
      %p160 = scmp.eq.s32.totalorder %s24, 0
      %p161 = por %p159, %p160
      %p162 = scmp.ne.s32.totalorder %s154, %s156
      %p163 = scmp.eq.s32.totalorder %s29, 1
      %p164 = por %p162, %p163
      %p165 = scmp.ne.s32.totalorder %s156, %s157
      %p166 = scmp.eq.s32.totalorder %s29, 0
      %p167 = por %p165, %p166
      %p168 = scmp.ne.s32.totalorder %s156, %s157
      %p169 = scmp.eq.s32.totalorder %s30, 1
      %p170 = por %p168, %p169
      %p172 = scmp.ne.s32.totalorder %s157, %s171
      %p173 = scmp.eq.s32.totalorder %s30, 0
      %p174 = por %p172, %p173
      %s176 = sadd.s32 %s175, 1
      %p179 = scmp.eq.s32.totalorder %s24, 1
      %p180 = scmp.ne.s32.totalorder %s175, %s177
      %p181 = scmp.eq.s32.totalorder %s24, 0
      %p182 = por %p180, %p181
      %p183 = scmp.ne.s32.totalorder %s175, %s177
      %p184 = scmp.eq.s32.totalorder %s29, 1
      %p185 = por %p183, %p184
      %p186 = scmp.ne.s32.totalorder %s177, %s178
      %p187 = scmp.eq.s32.totalorder %s29, 0
      %p188 = por %p186, %p187
      %p189 = scmp.ne.s32.totalorder %s177, %s178
      %p190 = scmp.eq.s32.totalorder %s30, 1
      %p191 = por %p189, %p190
      %p193 = scmp.ne.s32.totalorder %s178, %s192
      %p194 = scmp.eq.s32.totalorder %s30, 0
      %p195 = por %p193, %p194
      %s197 = sadd.s32 %s196, 1
      %p200 = scmp.eq.s32.totalorder %s24, 1
      %p201 = scmp.ne.s32.totalorder %s196, %s198
      %p202 = scmp.eq.s32.totalorder %s24, 0
      %p203 = por %p201, %p202
      %p204 = scmp.ne.s32.totalorder %s196, %s198
      %p205 = scmp.eq.s32.totalorder %s29, 1
      %p206 = por %p204, %p205
      %p207 = scmp.ne.s32.totalorder %s198, %s199
      %p208 = scmp.eq.s32.totalorder %s29, 0
      %p209 = por %p207, %p208
      %p210 = scmp.ne.s32.totalorder %s198, %s199
      %p211 = scmp.eq.s32.totalorder %s30, 1
      %p212 = por %p210, %p211
      %p214 = scmp.ne.s32.totalorder %s199, %s213
      %p215 = scmp.eq.s32.totalorder %s30, 0
      %p216 = por %p214, %p215
      %s218 = sadd.s32 %s217, 1
      %p221 = scmp.eq.s32.totalorder %s24, 1
      %p222 = scmp.ne.s32.totalorder %s217, %s219
      %p223 = scmp.eq.s32.totalorder %s24, 0
      %p224 = por %p222, %p223
      %p225 = scmp.ne.s32.totalorder %s217, %s219
      %p226 = scmp.eq.s32.totalorder %s29, 1
      %p227 = por %p225, %p226
      %p228 = scmp.ne.s32.totalorder %s219, %s220
      %p229 = scmp.eq.s32.totalorder %s29, 0
      %p230 = por %p228, %p229
      %p231 = scmp.ne.s32.totalorder %s219, %s220
      %p232 = scmp.eq.s32.totalorder %s30, 1
      %p233 = por %p231, %p232
      %p235 = scmp.ne.s32.totalorder %s220, %s234
      %p236 = scmp.eq.s32.totalorder %s30, 0
      %p237 = por %p235, %p236
      %s239 = sadd.s32 %s238, 1
      %p242 = scmp.eq.s32.totalorder %s24, 1
      %p243 = scmp.ne.s32.totalorder %s238, %s240
      %p244 = scmp.eq.s32.totalorder %s24, 0
      %p245 = por %p243, %p244
      %p246 = scmp.ne.s32.totalorder %s238, %s240
      %p247 = scmp.eq.s32.totalorder %s29, 1
      %p248 = por %p246, %p247
      %p249 = scmp.ne.s32.totalorder %s240, %s241
      %p250 = scmp.eq.s32.totalorder %s29, 0
      %p251 = por %p249, %p250
      %p252 = scmp.ne.s32.totalorder %s240, %s241
      %p253 = scmp.eq.s32.totalorder %s30, 1
      %p254 = por %p252, %p253
      %p256 = scmp.ne.s32.totalorder %s241, %s255
      %p257 = scmp.eq.s32.totalorder %s30, 0
      %p258 = por %p256, %p257
      %s260 = sadd.s32 %s259, 1
      %p263 = scmp.eq.s32.totalorder %s24, 1
      %p264 = scmp.ne.s32.totalorder %s259, %s261
      %p265 = scmp.eq.s32.totalorder %s24, 0
      %p266 = por %p264, %p265
      %p267 = scmp.ne.s32.totalorder %s259, %s261
      %p268 = scmp.eq.s32.totalorder %s29, 1
      %p269 = por %p267, %p268
      %p270 = scmp.ne.s32.totalorder %s261, %s262
      %p271 = scmp.eq.s32.totalorder %s29, 0
      %p272 = por %p270, %p271
      %p273 = scmp.ne.s32.totalorder %s261, %s262
      %p274 = scmp.eq.s32.totalorder %s30, 1
      %p275 = por %p273, %p274
      %p277 = scmp.ne.s32.totalorder %s262, %s276
      %p278 = scmp.eq.s32.totalorder %s30, 0
      %p279 = por %p277, %p278
      %s281 = sadd.s32 %s280, 1
      %p284 = scmp.eq.s32.totalorder %s24, 1
      %p285 = scmp.ne.s32.totalorder %s280, %s282
      %p286 = scmp.eq.s32.totalorder %s24, 0
      %p287 = por %p285, %p286
      %p288 = scmp.ne.s32.totalorder %s280, %s282
      %p289 = scmp.eq.s32.totalorder %s29, 1
      %p290 = por %p288, %p289
      %p291 = scmp.ne.s32.totalorder %s282, %s283
      %p292 = scmp.eq.s32.totalorder %s29, 0
      %p293 = por %p291, %p292
      %p294 = scmp.ne.s32.totalorder %s282, %s283
      %p295 = scmp.eq.s32.totalorder %s30, 1
      %p296 = por %p294, %p295
      %p298 = scmp.ne.s32.totalorder %s283, %s297
      %p299 = scmp.eq.s32.totalorder %s30, 0
      %p300 = por %p298, %p299
      %s302 = sadd.s32 %s301, 1
      %p305 = scmp.eq.s32.totalorder %s24, 1
      %p306 = scmp.ne.s32.totalorder %s301, %s303
      %p307 = scmp.eq.s32.totalorder %s24, 0
      %p308 = por %p306, %p307
      %p309 = scmp.ne.s32.totalorder %s301, %s303
      %p310 = scmp.eq.s32.totalorder %s29, 1
      %p311 = por %p309, %p310
      %p312 = scmp.ne.s32.totalorder %s303, %s304
      %p313 = scmp.eq.s32.totalorder %s29, 0
      %p314 = por %p312, %p313
      %p315 = scmp.ne.s32.totalorder %s303, %s304
      %p316 = scmp.eq.s32.totalorder %s30, 1
      %p317 = por %p315, %p316
      %p319 = scmp.ne.s32.totalorder %s304, %s318
      %p320 = scmp.eq.s32.totalorder %s30, 0
      %p321 = por %p319, %p320
      %s323 = sadd.s32 %s322, 1
      %p326 = scmp.eq.s32.totalorder %s24, 1
      %p327 = scmp.ne.s32.totalorder %s322, %s324
      %p328 = scmp.eq.s32.totalorder %s24, 0
      %p329 = por %p327, %p328
      %p330 = scmp.ne.s32.totalorder %s322, %s324
      %p331 = scmp.eq.s32.totalorder %s29, 1
      %p332 = por %p330, %p331
      %p333 = scmp.ne.s32.totalorder %s324, %s325
      %p334 = scmp.eq.s32.totalorder %s29, 0
      %p335 = por %p333, %p334
      %p336 = scmp.ne.s32.totalorder %s324, %s325
      %p337 = scmp.eq.s32.totalorder %s30, 1
      %p338 = por %p336, %p337
      %p340 = scmp.ne.s32.totalorder %s325, %s339
      %p341 = scmp.eq.s32.totalorder %s30, 0
      %p342 = por %p340, %p341
      %s343 = ssub.s32 %s31, %s43
      %s344 = ssub.s32 %s32, %s39
      %s345 = sor.u32 %s343, %s344
      %p346 = scmp.eq.s32.totalorder %s345, 0
      %s348 = sadd.s32 %s347, 1
      %s349 = scalar_select %p346, %s347, %s348
      %p352 = pneg %p346
      %p353 = scmp.eq.s32.totalorder %s24, 1
      %p354 = por %p352, %p353
      %p355 = scmp.ne.s32.totalorder %s347, %s350
      %p356 = scmp.eq.s32.totalorder %s24, 0
      %p357 = por %p355, %p356
      %p358 = scmp.ne.s32.totalorder %s347, %s350
      %p359 = scmp.eq.s32.totalorder %s29, 1
      %p360 = por %p358, %p359
      %p361 = scmp.ne.s32.totalorder %s350, %s351
      %p362 = scmp.eq.s32.totalorder %s29, 0
      %p363 = por %p361, %p362
      %p364 = scmp.ne.s32.totalorder %s350, %s351
      %p365 = scmp.eq.s32.totalorder %s30, 1
      %p366 = por %p364, %p365
      %p368 = scmp.ne.s32.totalorder %s351, %s367
      %p369 = scmp.eq.s32.totalorder %s30, 0
      %p370 = por %p368, %p369
      %p371 = scmp.le.s32.totalorder 1, %s24
      %p372 = scmp.lt.s32.totalorder %s24, 3
      %p373 = pnand %p371, %p372
      %p374 = pneg %p373
      // Predicated region
      $region9: #{tpu_custom_call.1} parent=5 // pred_check
        _
      $region10: #{tpu_custom_call.1} parent=5 // pred_check_branch
        %376 = sbr.rel (%p373) target = $region12
      $region11: #{tpu_custom_call.1} parent=5 // pred_region
        %s377 = ssub.s32 %s24, 1
        // Predicated region
        $region13: #{tpu_custom_call.1} parent=11 // pred_check
          %p378 = pneg %p83
        $region14: #{tpu_custom_call.1} parent=11 // pred_check_branch
          %380 = sbr.rel (%p378) target = $region16
        $region15: #{tpu_custom_call.1} parent=11 // pred_region
          _
        $region16: #{tpu_custom_call.1} parent=11 // pred_fallthru
          _
        // Predicated region
        $region17: #{tpu_custom_call.1} parent=11 // pred_check
          %p381 = pneg %p104
        $region18: #{tpu_custom_call.1} parent=11 // pred_check_branch
          %383 = sbr.rel (%p381) target = $region20
        $region19: #{tpu_custom_call.1} parent=11 // pred_region
          _
        $region20: #{tpu_custom_call.1} parent=11 // pred_fallthru
          _
        // Predicated region
        $region21: #{tpu_custom_call.1} parent=11 // pred_check
          %p384 = pneg %p125
        $region22: #{tpu_custom_call.1} parent=11 // pred_check_branch
          %386 = sbr.rel (%p384) target = $region24
        $region23: #{tpu_custom_call.1} parent=11 // pred_region
          _
        $region24: #{tpu_custom_call.1} parent=11 // pred_fallthru
          _
        // Predicated region
        $region25: #{tpu_custom_call.1} parent=11 // pred_check
          %p387 = pneg %p146
        $region26: #{tpu_custom_call.1} parent=11 // pred_check_branch
          %389 = sbr.rel (%p387) target = $region28
        $region27: #{tpu_custom_call.1} parent=11 // pred_region
          _
        $region28: #{tpu_custom_call.1} parent=11 // pred_fallthru
          _
        // Predicated region
        $region29: #{tpu_custom_call.1} parent=11 // pred_check
          %p390 = pneg %p167
        $region30: #{tpu_custom_call.1} parent=11 // pred_check_branch
          %392 = sbr.rel (%p390) target = $region32
        $region31: #{tpu_custom_call.1} parent=11 // pred_region
          _
        $region32: #{tpu_custom_call.1} parent=11 // pred_fallthru
          _
        // Predicated region
        $region33: #{tpu_custom_call.1} parent=11 // pred_check
          %p393 = pneg %p188
        $region34: #{tpu_custom_call.1} parent=11 // pred_check_branch
          %395 = sbr.rel (%p393) target = $region36
        $region35: #{tpu_custom_call.1} parent=11 // pred_region
          _
        $region36: #{tpu_custom_call.1} parent=11 // pred_fallthru
          _
        // Predicated region
        $region37: #{tpu_custom_call.1} parent=11 // pred_check
          %p396 = pneg %p209
        $region38: #{tpu_custom_call.1} parent=11 // pred_check_branch
          %398 = sbr.rel (%p396) target = $region40
        $region39: #{tpu_custom_call.1} parent=11 // pred_region
          _
        $region40: #{tpu_custom_call.1} parent=11 // pred_fallthru
          _
        // Predicated region
        $region41: #{tpu_custom_call.1} parent=11 // pred_check
          %p399 = pneg %p230
        $region42: #{tpu_custom_call.1} parent=11 // pred_check_branch
          %401 = sbr.rel (%p399) target = $region44
        $region43: #{tpu_custom_call.1} parent=11 // pred_region
          %s403 = ssub.s32 256, 256
          %404 = vsyncadd [#allocation6], %s403
          %s405 = sshll.u32 [#allocation5], 4
          %s406 = int_to_ptr.vmem [resolvable:$true] %s405
          %411 = dma.hbm_to_vmem [thread:$0]  %s8, 256, %s406, [#allocation6], 64, 64, 4
        $region44: #{tpu_custom_call.1} parent=11 // pred_fallthru
          _
        // Predicated region
        $region45: #{tpu_custom_call.1} parent=11 // pred_check
          %p412 = pneg %p251
        $region46: #{tpu_custom_call.1} parent=11 // pred_check_branch
          %414 = sbr.rel (%p412) target = $region48
        $region47: #{tpu_custom_call.1} parent=11 // pred_region
          _
        $region48: #{tpu_custom_call.1} parent=11 // pred_fallthru
          _
        // Predicated region
        $region49: #{tpu_custom_call.1} parent=11 // pred_check
          %p415 = pneg %p272
        $region50: #{tpu_custom_call.1} parent=11 // pred_check_branch
          %417 = sbr.rel (%p415) target = $region52
        $region51: #{tpu_custom_call.1} parent=11 // pred_region
          _
        $region52: #{tpu_custom_call.1} parent=11 // pred_fallthru
          _
        // Predicated region
        $region53: #{tpu_custom_call.1} parent=11 // pred_check
          %p418 = pneg %p293
        $region54: #{tpu_custom_call.1} parent=11 // pred_check_branch
          %420 = sbr.rel (%p418) target = $region56
        $region55: #{tpu_custom_call.1} parent=11 // pred_region
          _
        $region56: #{tpu_custom_call.1} parent=11 // pred_fallthru
          _
        // Predicated region
        $region57: #{tpu_custom_call.1} parent=11 // pred_check
          %p421 = pneg %p314
        $region58: #{tpu_custom_call.1} parent=11 // pred_check_branch
          %423 = sbr.rel (%p421) target = $region60
        $region59: #{tpu_custom_call.1} parent=11 // pred_region
          _
        $region60: #{tpu_custom_call.1} parent=11 // pred_fallthru
          _
        // Predicated region
        $region61: #{tpu_custom_call.1} parent=11 // pred_check
          %p424 = pneg %p335
        $region62: #{tpu_custom_call.1} parent=11 // pred_check_branch
          %426 = sbr.rel (%p424) target = $region64
        $region63: #{tpu_custom_call.1} parent=11 // pred_region
          _
        $region64: #{tpu_custom_call.1} parent=11 // pred_fallthru
          _
      $region12: #{tpu_custom_call.1} parent=5 // pred_fallthru
        _
      %p427 = scmp.lt.s32.totalorder %s24, 2
      // Predicated region
      $region65: #{tpu_custom_call.1} parent=5 // pred_check
        %p428 = pneg %p427
      $region66: #{tpu_custom_call.1} parent=5 // pred_check_branch
        %430 = sbr.rel (%p428) target = $region68
      $region67: #{tpu_custom_call.1} parent=5 // pred_region
        // Predicated region
        $region69: #{tpu_custom_call.1} parent=67 // pred_check
          %p431 = pneg %p56
        $region70: #{tpu_custom_call.1} parent=67 // pred_check_branch
          %433 = sbr.rel (%p431) target = $region72
        $region71: #{tpu_custom_call.1} parent=67 // pred_region
          %p434 = scmp.lt.s32.totalorder %s31, 1
          %s435 = scalar_select %p434, %s31, 1
          %s436 = smul.addr %s435, 8
          %s437 = scalar_lea.vmem %s0, %s436
        $region72: #{tpu_custom_call.1} parent=67 // pred_fallthru
          _
      $region68: #{tpu_custom_call.1} parent=5 // pred_fallthru
        _
      %p438 = scmp.le.s32.totalorder 1, %s24
      %p439 = scmp.lt.s32.totalorder %s24, 3
      %p440 = pnand %p438, %p439
      %p441 = pneg %p440
      // Predicated region
      $region73: #{tpu_custom_call.1} parent=5 // pred_check
        _
      $region74: #{tpu_custom_call.1} parent=5 // pred_check_branch
        %443 = sbr.rel (%p440) target = $region76
      $region75: #{tpu_custom_call.1} parent=5 // pred_region
        %s444 = ssub.s32 %s24, 1
        // Predicated region
        $region77: #{tpu_custom_call.1} parent=75 // pred_check
          %p445 = pneg %p230
        $region78: #{tpu_custom_call.1} parent=75 // pred_check_branch
          %447 = sbr.rel (%p445) target = $region80
        $region79: #{tpu_custom_call.1} parent=75 // pred_region
          %448 = dma.done [#allocation6], 256
        $region80: #{tpu_custom_call.1} parent=75 // pred_fallthru
          _
        %p449 = scmp.lt.s32.totalorder %s33, 1
        %s450 = scalar_select %p449, %s33, 1
        %s451 = smul.addr %s450, 8
        %s452 = scalar_lea.vmem %s0, %s451
        %p453 = pneg %p62
        %p454 = pneg %p59
        %p455 = pneg %p83
        %p456 = pneg %p80
        %p457 = pneg %p104
        %p458 = pneg %p101
        %p459 = pneg %p125
        %p460 = pneg %p122
        %p461 = pneg %p146
        %p462 = pneg %p143
        %p463 = pneg %p167
        %p464 = pneg %p164
        %p465 = pneg %p188
        %p466 = pneg %p185
        %p467 = pneg %p209
        %p468 = pneg %p206
        %p469 = pneg %p230
        %p470 = pneg %p227
        %p471 = pneg %p251
        %p472 = pneg %p248
        %p473 = pneg %p272
        %p474 = pneg %p269
        %p475 = pneg %p293
        %p476 = pneg %p290
        %p477 = pneg %p314
        %p478 = pneg %p311
        %p479 = pneg %p335
        %p480 = pneg %p332
        %p481 = pneg %p363
        %p482 = pneg %p360
        %s483 = sand.u32 %s350, 1
        %s484 = scalar_lea.sflag [#allocation7], %s483
        %s485 = sand.u32 %s350, 1
        %s486 = smul.addr %s485, 8
        %s487 = scalar_lea.vmem [#allocation8], %s486
        %p488 = scmp.lt.s32.totalorder %s33, 1
        %s489 = scalar_select %p488, %s33, 1
        %s490 = smul.addr %s489, 8
        %s491 = scalar_lea.vmem %s0, %s490
        %p493 = scmp.eq.s32.totalorder %s34, 0
        // Predicated region
        $region81: #{tpu_custom_call.1} parent=75 // pred_check
          %p494 = pneg %p493
        $region82: #{tpu_custom_call.1} parent=75 // pred_check_branch
          %496 = sbr.rel (%p494) target = $region84
        $region83: #{tpu_custom_call.1} parent=75 // pred_region
          %v497 = vld [vmem:[%s491] sm:$0xff]
          %v498 = vpack.c.bf16 %v497, %v497
          %v499 = vld [vmem:[%s2] sm:$0xf]
          %v500 = vld [vmem:[%s2 + $0x4] sm:$0xf]
          %v501 = vld [vmem:[%s2 + $0x8] sm:$0xf]
          %v502 = vld [vmem:[%s2 + $0xc] sm:$0xf]
          %v507 = vunpack.c.l.b16 %v499
          %v508 = vunpack.c.l.b16 %v500
          %v509 = vunpack.c.l.b16 %v501
          %v510 = vunpack.c.l.b16 %v502
          %v511 = vpack.c.b16 %v508, %v507
          %v512 = vpack.c.b16 %v510, %v509
          %vm515 = vcmask 261120
          %v517 = vsel %vm515, %v498, 0
          %519 = vmatprep.subr.bf16.mxu0 0
          %520 = vmatpush1.bf16.msra.mxu0 %v511
          %521 = vmatprep.subr.bf16.mxu0 0
          %522 = vmatpush1.bf16.msra.mxu0 %v512
          %523 = vmatprep.subr.bf16.mxu0 0
          %524 = vmatpush1.bf16.msra.mxu0 0
          %525 = vmatprep.subr.bf16.mxu0 0
          %526 = vmatpush1.bf16.msra.mxu0 0
          %527 = vmatprep.subr.bf16.mxu0 0
          %528 = vmatpush1.bf16.msra.mxu0 0
          %529 = vmatprep.subr.bf16.mxu0 0
          %530 = vmatpush1.bf16.msra.mxu0 0
          %531 = vmatprep.subr.bf16.mxu0 0
          %532 = vmatpush1.bf16.msra.mxu0 0
          %533 = vmatprep.subr.bf16.mxu0 0
          %534 = vmatpush1.bf16.msra.mxu0 0
          %535 = vmatprep.subr.bf16.mxu0 0
          %536 = vmatpush1.bf16.msra.mxu0 0
          %537 = vmatprep.subr.bf16.mxu0 0
          %538 = vmatpush1.bf16.msra.mxu0 0
          %539 = vmatprep.subr.bf16.mxu0 0
          %540 = vmatpush1.bf16.msra.mxu0 0
          %541 = vmatprep.subr.bf16.mxu0 0
          %542 = vmatpush1.bf16.msra.mxu0 0
          %543 = vmatprep.subr.bf16.mxu0 0
          %544 = vmatpush1.bf16.msra.mxu0 0
          %545 = vmatprep.subr.bf16.mxu0 0
          %546 = vmatpush1.bf16.msra.mxu0 0
          %547 = vmatprep.subr.bf16.mxu0 0
          %548 = vmatpush1.bf16.msra.mxu0 0
          %549 = vmatprep.subr.bf16.mxu0 0
          %550 = vmatpush1.bf16.msra.mxu0 0
          %551 = vmatprep.mubr.bf16.mxu0 0
          %552 = vmatmul.mubr.bf16.gmra.mrb[0].mxu0 %v517
          %v553 = vpop.f32.mrb[0].mxu0
          %v554 = vadd.f32 0.0, %v553
          %v555 = vpop.f32.mrb[0].mxu0
          %v556 = vpop.f32.mrb[0].mxu0
          %v557 = vpop.f32.mrb[0].mxu0
          %558 = vdwg.mxu0
          %v559 = vpack.c.bf16 %v554, %v554
          %vm560 = vcmask 257024
          %561 = vst.msk [vmem:[#allocation2] sm:$0xf] %vm560, %v559
          %v562 = vld [vmem:[%s3] sm:$0xf]
          %v563 = vld [vmem:[%s3 + $0x4] sm:$0xf]
          %v564 = vld [vmem:[%s3 + $0x8] sm:$0xf]
          %v565 = vld [vmem:[%s3 + $0xc] sm:$0xf]
          %v570 = vunpack.c.l.b16 %v562
          %v571 = vunpack.c.l.b16 %v563
          %v572 = vunpack.c.l.b16 %v564
          %v573 = vunpack.c.l.b16 %v565
          %v574 = vpack.c.b16 %v571, %v570
          %v575 = vpack.c.b16 %v573, %v572
          %578 = vmatprep.subr.bf16.mxu0 0
          %579 = vmatpush1.bf16.msra.mxu0 %v574
          %580 = vmatprep.subr.bf16.mxu0 0
          %581 = vmatpush1.bf16.msra.mxu0 %v575
          %582 = vmatprep.subr.bf16.mxu0 0
          %583 = vmatpush1.bf16.msra.mxu0 0
          %584 = vmatprep.subr.bf16.mxu0 0
          %585 = vmatpush1.bf16.msra.mxu0 0
          %586 = vmatprep.subr.bf16.mxu0 0
          %587 = vmatpush1.bf16.msra.mxu0 0
          %588 = vmatprep.subr.bf16.mxu0 0
          %589 = vmatpush1.bf16.msra.mxu0 0
          %590 = vmatprep.subr.bf16.mxu0 0
          %591 = vmatpush1.bf16.msra.mxu0 0
          %592 = vmatprep.subr.bf16.mxu0 0
          %593 = vmatpush1.bf16.msra.mxu0 0
          %594 = vmatprep.subr.bf16.mxu0 0
          %595 = vmatpush1.bf16.msra.mxu0 0
          %596 = vmatprep.subr.bf16.mxu0 0
          %597 = vmatpush1.bf16.msra.mxu0 0
          %598 = vmatprep.subr.bf16.mxu0 0
          %599 = vmatpush1.bf16.msra.mxu0 0
          %600 = vmatprep.subr.bf16.mxu0 0
          %601 = vmatpush1.bf16.msra.mxu0 0
          %602 = vmatprep.subr.bf16.mxu0 0
          %603 = vmatpush1.bf16.msra.mxu0 0
          %604 = vmatprep.subr.bf16.mxu0 0
          %605 = vmatpush1.bf16.msra.mxu0 0
          %606 = vmatprep.subr.bf16.mxu0 0
          %607 = vmatpush1.bf16.msra.mxu0 0
          %608 = vmatprep.subr.bf16.mxu0 0
          %609 = vmatpush1.bf16.msra.mxu0 0
          %610 = vmatprep.mubr.bf16.mxu0 0
          %611 = vmatmul.mubr.bf16.gmra.mrb[0].mxu0 %v517
          %v612 = vpop.f32.mrb[0].mxu0
          %v613 = vadd.f32 0.0, %v612
          %v614 = vpop.f32.mrb[0].mxu0
          %v615 = vpop.f32.mrb[0].mxu0
          %v616 = vpop.f32.mrb[0].mxu0
          %617 = vdwg.mxu0
          %v618 = vpack.c.bf16 %v613, %v613
          %619 = vst.msk [vmem:[#allocation3] sm:$0xf] %vm560, %v618
        $region84: #{tpu_custom_call.1} parent=75 // pred_fallthru
          _
        %v620 = vld [vmem:[%s491] sm:$0xff]
        %v621 = vpack.c.bf16 %v620, %v620
        %v622 = vld [vmem:[%s1] sm:$0xf]
        %v623 = vld [vmem:[%s1 + $0x4] sm:$0xf]
        %v624 = vld [vmem:[%s1 + $0x8] sm:$0xf]
        %v625 = vld [vmem:[%s1 + $0xc] sm:$0xf]
        %v630 = vunpack.c.l.b16 %v622
        %v631 = vunpack.c.l.b16 %v623
        %v632 = vunpack.c.l.b16 %v624
        %v633 = vunpack.c.l.b16 %v625
        %v634 = vpack.c.b16 %v631, %v630
        %v635 = vpack.c.b16 %v633, %v632
        %vm638 = vcmask 261120
        %v640 = vsel %vm638, %v621, 0
        %642 = vmatprep.subr.bf16.mxu0 0
        %643 = vmatpush1.bf16.msra.mxu0 %v634
        %644 = vmatprep.subr.bf16.mxu0 0
        %645 = vmatpush1.bf16.msra.mxu0 %v635
        %646 = vmatprep.subr.bf16.mxu0 0
        %647 = vmatpush1.bf16.msra.mxu0 0
        %648 = vmatprep.subr.bf16.mxu0 0
        %649 = vmatpush1.bf16.msra.mxu0 0
        %650 = vmatprep.subr.bf16.mxu0 0
        %651 = vmatpush1.bf16.msra.mxu0 0
        %652 = vmatprep.subr.bf16.mxu0 0
        %653 = vmatpush1.bf16.msra.mxu0 0
        %654 = vmatprep.subr.bf16.mxu0 0
        %655 = vmatpush1.bf16.msra.mxu0 0
        %656 = vmatprep.subr.bf16.mxu0 0
        %657 = vmatpush1.bf16.msra.mxu0 0
        %658 = vmatprep.subr.bf16.mxu0 0
        %659 = vmatpush1.bf16.msra.mxu0 0
        %660 = vmatprep.subr.bf16.mxu0 0
        %661 = vmatpush1.bf16.msra.mxu0 0
        %662 = vmatprep.subr.bf16.mxu0 0
        %663 = vmatpush1.bf16.msra.mxu0 0
        %664 = vmatprep.subr.bf16.mxu0 0
        %665 = vmatpush1.bf16.msra.mxu0 0
        %666 = vmatprep.subr.bf16.mxu0 0
        %667 = vmatpush1.bf16.msra.mxu0 0
        %668 = vmatprep.subr.bf16.mxu0 0
        %669 = vmatpush1.bf16.msra.mxu0 0
        %670 = vmatprep.subr.bf16.mxu0 0
        %671 = vmatpush1.bf16.msra.mxu0 0
        %672 = vmatprep.subr.bf16.mxu0 0
        %673 = vmatpush1.bf16.msra.mxu0 0
        %674 = vmatprep.mubr.bf16.mxu0 0
        %675 = vmatmul.mubr.bf16.gmra.mrb[0].mxu0 %v640
        %v676 = vpop.f32.mrb[0].mxu0
        %v677 = vadd.f32 0.0, %v676
        %v678 = vpop.f32.mrb[0].mxu0
        %v679 = vpop.f32.mrb[0].mxu0
        %v680 = vpop.f32.mrb[0].mxu0
        %681 = vdwg.mxu0
        %v682 = vpack.c.bf16 %v677, %v677
        %v683 = vld [vmem:[#allocation2] sm:$0xf]
        %v684 = vld [vmem:[#allocation3] sm:$0xf]
        %vm685 = vcmask 64512
        %v687 = vsel %vm685, %v682, 0
        %v690 = vsel %vm685, %v683, 0
        %692 = vmatprep.subr.bf16.mxu0 0
        %693 = vmatpush1.bf16.xpose.msra.mxu0 %v690
        %694 = vmatprep.subr.bf16.mxu0 0
        %695 = vmatpush1.bf16.xpose.msra.mxu0 0
        %696 = vmatprep.subr.bf16.mxu0 0
        %697 = vmatpush1.bf16.xpose.msra.mxu0 0
        %698 = vmatprep.subr.bf16.mxu0 0
        %699 = vmatpush1.bf16.xpose.msra.mxu0 0
        %700 = vmatprep.subr.bf16.mxu0 0
        %701 = vmatpush1.bf16.xpose.msra.mxu0 0
        %702 = vmatprep.subr.bf16.mxu0 0
        %703 = vmatpush1.bf16.xpose.msra.mxu0 0
        %704 = vmatprep.subr.bf16.mxu0 0
        %705 = vmatpush1.bf16.xpose.msra.mxu0 0
        %706 = vmatprep.subr.bf16.mxu0 0
        %707 = vmatpush1.bf16.xpose.msra.mxu0 0
        %708 = vmatprep.subr.bf16.mxu0 0
        %709 = vmatpush1.bf16.xpose.msra.mxu0 0
        %710 = vmatprep.subr.bf16.mxu0 0
        %711 = vmatpush1.bf16.xpose.msra.mxu0 0
        %712 = vmatprep.subr.bf16.mxu0 0
        %713 = vmatpush1.bf16.xpose.msra.mxu0 0
        %714 = vmatprep.subr.bf16.mxu0 0
        %715 = vmatpush1.bf16.xpose.msra.mxu0 0
        %716 = vmatprep.subr.bf16.mxu0 0
        %717 = vmatpush1.bf16.xpose.msra.mxu0 0
        %718 = vmatprep.subr.bf16.mxu0 0
        %719 = vmatpush1.bf16.xpose.msra.mxu0 0
        %720 = vmatprep.subr.bf16.mxu0 0
        %721 = vmatpush1.bf16.xpose.msra.mxu0 0
        %722 = vmatprep.subr.bf16.mxu0 0
        %723 = vmatpush1.bf16.xpose.msra.mxu0 0
        %724 = vmatprep.mubr.bf16.mxu0 0
        %725 = vmatmul.mubr.bf16.gmra.mrb[0].mxu0 %v687
        %v726 = vpop.f32.mrb[0].mxu0
        %v727 = vadd.f32 0.0, %v726
        %v728 = vpop.f32.mrb[0].mxu0
        %v729 = vpop.f32.mrb[0].mxu0
        %v730 = vpop.f32.mrb[0].mxu0
        %731 = vdwg.mxu0
        %v732 = vsel %vm685, %v727, -inf
        %733 = vmax.xlane.f32.xlu0 %v732
        %v734 = vpop.xlane.xlu0 %733
        %v735 = vsub.f32 %v727, %v734
        %v736 = vmul.f32 %v735, 1.442695
        %v737 = vpow.pop %v736
        %v738 = vsel %vm685, %v737, 0.0
        %739 = vadd.xlane.f32.xlu0 %v738
        %v740 = vpop.xlane.xlu0 %739
        %v741 = vpack.c.bf16 %v737, %v737
        %v743 = vsel %vm685, %v741, 0
        %vm745 = vcmask 1043456
        %v747 = vsel %vm745, %v684, 0
        %749 = vmatprep.subr.bf16.mxu0 0
        %750 = vmatpush1.bf16.msra.mxu0 %v747
        %751 = vmatprep.subr.bf16.mxu0 0
        %752 = vmatpush1.bf16.msra.mxu0 0
        %753 = vmatprep.subr.bf16.mxu0 0
        %754 = vmatpush1.bf16.msra.mxu0 0
        %755 = vmatprep.subr.bf16.mxu0 0
        %756 = vmatpush1.bf16.msra.mxu0 0
        %757 = vmatprep.subr.bf16.mxu0 0
        %758 = vmatpush1.bf16.msra.mxu0 0
        %759 = vmatprep.subr.bf16.mxu0 0
        %760 = vmatpush1.bf16.msra.mxu0 0
        %761 = vmatprep.subr.bf16.mxu0 0
        %762 = vmatpush1.bf16.msra.mxu0 0
        %763 = vmatprep.subr.bf16.mxu0 0
        %764 = vmatpush1.bf16.msra.mxu0 0
        %765 = vmatprep.subr.bf16.mxu0 0
        %766 = vmatpush1.bf16.msra.mxu0 0
        %767 = vmatprep.subr.bf16.mxu0 0
        %768 = vmatpush1.bf16.msra.mxu0 0
        %769 = vmatprep.subr.bf16.mxu0 0
        %770 = vmatpush1.bf16.msra.mxu0 0
        %771 = vmatprep.subr.bf16.mxu0 0
        %772 = vmatpush1.bf16.msra.mxu0 0
        %773 = vmatprep.subr.bf16.mxu0 0
        %774 = vmatpush1.bf16.msra.mxu0 0
        %775 = vmatprep.subr.bf16.mxu0 0
        %776 = vmatpush1.bf16.msra.mxu0 0
        %777 = vmatprep.subr.bf16.mxu0 0
        %778 = vmatpush1.bf16.msra.mxu0 0
        %779 = vmatprep.subr.bf16.mxu0 0
        %780 = vmatpush1.bf16.msra.mxu0 0
        %781 = vmatprep.mubr.bf16.mxu0 0
        %782 = vmatmul.mubr.bf16.gmra.mrb[0].mxu0 %v743
        %v783 = vpop.f32.mrb[0].mxu0
        %v784 = vadd.f32 0.0, %v783
        %v785 = vpop.f32.mrb[0].mxu0
        %v786 = vpop.f32.mrb[0].mxu0
        %v787 = vpop.f32.mrb[0].mxu0
        %788 = vdwg.mxu0
        %v789 = vrcp.pop %v740
        %v790 = vmul.f32 %v784, %v789
        %791 = vst.msk [vmem:[#allocation4] sm:$0xff] %vm685, %v790
        %793 = vrot.lane.b32.xlu0 %v682, 120
        %v794 = vpop.permute.xlu0 %793
        %v796 = vunpack.c.l.b16 %v683
        %v797 = vpack.c.b16 %v796, %v796
        %798 = vrot.lane.b32.xlu0 %v797, 120
        %v799 = vpop.permute.xlu0 %798
        %v801 = vsel %vm685, %v794, 0
        %v804 = vsel %vm685, %v799, 0
        %806 = vmatprep.subr.bf16.mxu0 0
        %807 = vmatpush1.bf16.xpose.msra.mxu0 %v804
        %808 = vmatprep.subr.bf16.mxu0 0
        %809 = vmatpush1.bf16.xpose.msra.mxu0 0
        %810 = vmatprep.subr.bf16.mxu0 0
        %811 = vmatpush1.bf16.xpose.msra.mxu0 0
        %812 = vmatprep.subr.bf16.mxu0 0
        %813 = vmatpush1.bf16.xpose.msra.mxu0 0
        %814 = vmatprep.subr.bf16.mxu0 0
        %815 = vmatpush1.bf16.xpose.msra.mxu0 0
        %816 = vmatprep.subr.bf16.mxu0 0
        %817 = vmatpush1.bf16.xpose.msra.mxu0 0
        %818 = vmatprep.subr.bf16.mxu0 0
        %819 = vmatpush1.bf16.xpose.msra.mxu0 0
        %820 = vmatprep.subr.bf16.mxu0 0
        %821 = vmatpush1.bf16.xpose.msra.mxu0 0
        %822 = vmatprep.subr.bf16.mxu0 0
        %823 = vmatpush1.bf16.xpose.msra.mxu0 0
        %824 = vmatprep.subr.bf16.mxu0 0
        %825 = vmatpush1.bf16.xpose.msra.mxu0 0
        %826 = vmatprep.subr.bf16.mxu0 0
        %827 = vmatpush1.bf16.xpose.msra.mxu0 0
        %828 = vmatprep.subr.bf16.mxu0 0
        %829 = vmatpush1.bf16.xpose.msra.mxu0 0
        %830 = vmatprep.subr.bf16.mxu0 0
        %831 = vmatpush1.bf16.xpose.msra.mxu0 0
        %832 = vmatprep.subr.bf16.mxu0 0
        %833 = vmatpush1.bf16.xpose.msra.mxu0 0
        %834 = vmatprep.subr.bf16.mxu0 0
        %835 = vmatpush1.bf16.xpose.msra.mxu0 0
        %836 = vmatprep.subr.bf16.mxu0 0
        %837 = vmatpush1.bf16.xpose.msra.mxu0 0
        %838 = vmatprep.mubr.bf16.mxu0 0
        %839 = vmatmul.mubr.bf16.gmra.mrb[0].mxu0 %v801
        %v840 = vpop.f32.mrb[0].mxu0
        %v841 = vadd.f32 0.0, %v840
        %v842 = vpop.f32.mrb[0].mxu0
        %v843 = vpop.f32.mrb[0].mxu0
        %v844 = vpop.f32.mrb[0].mxu0
        %845 = vdwg.mxu0
        %v846 = vsel %vm685, %v841, -inf
        %847 = vmax.xlane.f32.xlu0 %v846
        %v848 = vpop.xlane.xlu0 %847
        %v849 = vsub.f32 %v841, %v848
        %v850 = vmul.f32 %v849, 1.442695
        %v851 = vpow.pop %v850
        %v852 = vsel %vm685, %v851, 0.0
        %853 = vadd.xlane.f32.xlu0 %v852
        %v854 = vpop.xlane.xlu0 %853
        %v855 = vpack.c.bf16 %v851, %v851
        %v857 = vunpack.c.l.b16 %v684
        %v858 = vpack.c.b16 %v857, %v857
        %859 = vrot.lane.b32.xlu0 %v858, 120
        %v860 = vpop.permute.xlu0 %859
        %v862 = vsel %vm685, %v855, 0
        %v865 = vsel %vm745, %v860, 0
        %867 = vmatprep.subr.bf16.mxu0 0
        %868 = vmatpush1.bf16.msra.mxu0 %v865
        %869 = vmatprep.subr.bf16.mxu0 0
        %870 = vmatpush1.bf16.msra.mxu0 0
        %871 = vmatprep.subr.bf16.mxu0 0
        %872 = vmatpush1.bf16.msra.mxu0 0
        %873 = vmatprep.subr.bf16.mxu0 0
        %874 = vmatpush1.bf16.msra.mxu0 0
        %875 = vmatprep.subr.bf16.mxu0 0
        %876 = vmatpush1.bf16.msra.mxu0 0
        %877 = vmatprep.subr.bf16.mxu0 0
        %878 = vmatpush1.bf16.msra.mxu0 0
        %879 = vmatprep.subr.bf16.mxu0 0
        %880 = vmatpush1.bf16.msra.mxu0 0
        %881 = vmatprep.subr.bf16.mxu0 0
        %882 = vmatpush1.bf16.msra.mxu0 0
        %883 = vmatprep.subr.bf16.mxu0 0
        %884 = vmatpush1.bf16.msra.mxu0 0
        %885 = vmatprep.subr.bf16.mxu0 0
        %886 = vmatpush1.bf16.msra.mxu0 0
        %887 = vmatprep.subr.bf16.mxu0 0
        %888 = vmatpush1.bf16.msra.mxu0 0
        %889 = vmatprep.subr.bf16.mxu0 0
        %890 = vmatpush1.bf16.msra.mxu0 0
        %891 = vmatprep.subr.bf16.mxu0 0
        %892 = vmatpush1.bf16.msra.mxu0 0
        %893 = vmatprep.subr.bf16.mxu0 0
        %894 = vmatpush1.bf16.msra.mxu0 0
        %895 = vmatprep.subr.bf16.mxu0 0
        %896 = vmatpush1.bf16.msra.mxu0 0
        %897 = vmatprep.subr.bf16.mxu0 0
        %898 = vmatpush1.bf16.msra.mxu0 0
        %899 = vmatprep.mubr.bf16.mxu0 0
        %900 = vmatmul.mubr.bf16.gmra.mrb[0].mxu0 %v862
        %v901 = vpop.f32.mrb[0].mxu0
        %v902 = vadd.f32 0.0, %v901
        %v903 = vpop.f32.mrb[0].mxu0
        %v904 = vpop.f32.mrb[0].mxu0
        %v905 = vpop.f32.mrb[0].mxu0
        %906 = vdwg.mxu0
        %v907 = vrcp.pop %v854
        %v908 = vmul.f32 %v902, %v907
        %910 = vrot.lane.b32.xlu0 %v908, 8
        %v911 = vpop.permute.xlu0 %910
        %vm913 = vcmask 130112
        %914 = vst.msk [vmem:[#allocation4] sm:$0xff] %vm913, %v911
        %915 = vrot.lane.b32.xlu0 %v682, 112
        %v916 = vpop.permute.xlu0 %915
        %917 = vrot.lane.b32.xlu0 %v797, 112
        %v918 = vpop.permute.xlu0 %917
        %v920 = vsel %vm685, %v916, 0
        %v923 = vsel %vm685, %v918, 0
        %925 = vmatprep.subr.bf16.mxu0 0
        %926 = vmatpush1.bf16.xpose.msra.mxu0 %v923
        %927 = vmatprep.subr.bf16.mxu0 0
        %928 = vmatpush1.bf16.xpose.msra.mxu0 0
        %929 = vmatprep.subr.bf16.mxu0 0
        %930 = vmatpush1.bf16.xpose.msra.mxu0 0
        %931 = vmatprep.subr.bf16.mxu0 0
        %932 = vmatpush1.bf16.xpose.msra.mxu0 0
        %933 = vmatprep.subr.bf16.mxu0 0
        %934 = vmatpush1.bf16.xpose.msra.mxu0 0
        %935 = vmatprep.subr.bf16.mxu0 0
        %936 = vmatpush1.bf16.xpose.msra.mxu0 0
        %937 = vmatprep.subr.bf16.mxu0 0
        %938 = vmatpush1.bf16.xpose.msra.mxu0 0
        %939 = vmatprep.subr.bf16.mxu0 0
        %940 = vmatpush1.bf16.xpose.msra.mxu0 0
        %941 = vmatprep.subr.bf16.mxu0 0
        %942 = vmatpush1.bf16.xpose.msra.mxu0 0
        %943 = vmatprep.subr.bf16.mxu0 0
        %944 = vmatpush1.bf16.xpose.msra.mxu0 0
        %945 = vmatprep.subr.bf16.mxu0 0
        %946 = vmatpush1.bf16.xpose.msra.mxu0 0
        %947 = vmatprep.subr.bf16.mxu0 0
        %948 = vmatpush1.bf16.xpose.msra.mxu0 0
        %949 = vmatprep.subr.bf16.mxu0 0
        %950 = vmatpush1.bf16.xpose.msra.mxu0 0
        %951 = vmatprep.subr.bf16.mxu0 0
        %952 = vmatpush1.bf16.xpose.msra.mxu0 0
        %953 = vmatprep.subr.bf16.mxu0 0
        %954 = vmatpush1.bf16.xpose.msra.mxu0 0
        %955 = vmatprep.subr.bf16.mxu0 0
        %956 = vmatpush1.bf16.xpose.msra.mxu0 0
        %957 = vmatprep.mubr.bf16.mxu0 0
        %958 = vmatmul.mubr.bf16.gmra.mrb[0].mxu0 %v920
        %v959 = vpop.f32.mrb[0].mxu0
        %v960 = vadd.f32 0.0, %v959
        %v961 = vpop.f32.mrb[0].mxu0
        %v962 = vpop.f32.mrb[0].mxu0
        %v963 = vpop.f32.mrb[0].mxu0
        %964 = vdwg.mxu0
        %v965 = vsel %vm685, %v960, -inf
        %966 = vmax.xlane.f32.xlu0 %v965
        %v967 = vpop.xlane.xlu0 %966
        %v968 = vsub.f32 %v960, %v967
        %v969 = vmul.f32 %v968, 1.442695
        %v970 = vpow.pop %v969
        %v971 = vsel %vm685, %v970, 0.0
        %972 = vadd.xlane.f32.xlu0 %v971
        %v973 = vpop.xlane.xlu0 %972
        %v974 = vpack.c.bf16 %v970, %v970
        %975 = vrot.lane.b32.xlu0 %v858, 112
        %v976 = vpop.permute.xlu0 %975
        %v978 = vsel %vm685, %v974, 0
        %v981 = vsel %vm745, %v976, 0
        %983 = vmatprep.subr.bf16.mxu0 0
        %984 = vmatpush1.bf16.msra.mxu0 %v981
        %985 = vmatprep.subr.bf16.mxu0 0
        %986 = vmatpush1.bf16.msra.mxu0 0
        %987 = vmatprep.subr.bf16.mxu0 0
        %988 = vmatpush1.bf16.msra.mxu0 0
        %989 = vmatprep.subr.bf16.mxu0 0
        %990 = vmatpush1.bf16.msra.mxu0 0
        %991 = vmatprep.subr.bf16.mxu0 0
        %992 = vmatpush1.bf16.msra.mxu0 0
        %993 = vmatprep.subr.bf16.mxu0 0
        %994 = vmatpush1.bf16.msra.mxu0 0
        %995 = vmatprep.subr.bf16.mxu0 0
        %996 = vmatpush1.bf16.msra.mxu0 0
        %997 = vmatprep.subr.bf16.mxu0 0
        %998 = vmatpush1.bf16.msra.mxu0 0
        %999 = vmatprep.subr.bf16.mxu0 0
        %1000 = vmatpush1.bf16.msra.mxu0 0
        %1001 = vmatprep.subr.bf16.mxu0 0
        %1002 = vmatpush1.bf16.msra.mxu0 0
        %1003 = vmatprep.subr.bf16.mxu0 0
        %1004 = vmatpush1.bf16.msra.mxu0 0
        %1005 = vmatprep.subr.bf16.mxu0 0
        %1006 = vmatpush1.bf16.msra.mxu0 0
        %1007 = vmatprep.subr.bf16.mxu0 0
        %1008 = vmatpush1.bf16.msra.mxu0 0
        %1009 = vmatprep.subr.bf16.mxu0 0
        %1010 = vmatpush1.bf16.msra.mxu0 0
        %1011 = vmatprep.subr.bf16.mxu0 0
        %1012 = vmatpush1.bf16.msra.mxu0 0
        %1013 = vmatprep.subr.bf16.mxu0 0
        %1014 = vmatpush1.bf16.msra.mxu0 0
        %1015 = vmatprep.mubr.bf16.mxu0 0
        %1016 = vmatmul.mubr.bf16.gmra.mrb[0].mxu0 %v978
        %v1017 = vpop.f32.mrb[0].mxu0
        %v1018 = vadd.f32 0.0, %v1017
        %v1019 = vpop.f32.mrb[0].mxu0
        %v1020 = vpop.f32.mrb[0].mxu0
        %v1021 = vpop.f32.mrb[0].mxu0
        %1022 = vdwg.mxu0
        %v1023 = vrcp.pop %v973
        %v1024 = vmul.f32 %v1018, %v1023
        %1026 = vrot.lane.b32.xlu0 %v1024, 16
        %v1027 = vpop.permute.xlu0 %1026
        %vm1029 = vcmask 195712
        %1030 = vst.msk [vmem:[#allocation4] sm:$0xff] %vm1029, %v1027
        %1031 = vrot.lane.b32.xlu0 %v682, 104
        %v1032 = vpop.permute.xlu0 %1031
        %1033 = vrot.lane.b32.xlu0 %v797, 104
        %v1034 = vpop.permute.xlu0 %1033
        %v1036 = vsel %vm685, %v1032, 0
        %v1039 = vsel %vm685, %v1034, 0
        %1041 = vmatprep.subr.bf16.mxu0 0
        %1042 = vmatpush1.bf16.xpose.msra.mxu0 %v1039
        %1043 = vmatprep.subr.bf16.mxu0 0
        %1044 = vmatpush1.bf16.xpose.msra.mxu0 0
        %1045 = vmatprep.subr.bf16.mxu0 0
        %1046 = vmatpush1.bf16.xpose.msra.mxu0 0
        %1047 = vmatprep.subr.bf16.mxu0 0
        %1048 = vmatpush1.bf16.xpose.msra.mxu0 0
        %1049 = vmatprep.subr.bf16.mxu0 0
        %1050 = vmatpush1.bf16.xpose.msra.mxu0 0
        %1051 = vmatprep.subr.bf16.mxu0 0
        %1052 = vmatpush1.bf16.xpose.msra.mxu0 0
        %1053 = vmatprep.subr.bf16.mxu0 0
        %1054 = vmatpush1.bf16.xpose.msra.mxu0 0
        %1055 = vmatprep.subr.bf16.mxu0 0
        %1056 = vmatpush1.bf16.xpose.msra.mxu0 0
        %1057 = vmatprep.subr.bf16.mxu0 0
        %1058 = vmatpush1.bf16.xpose.msra.mxu0 0
        %1059 = vmatprep.subr.bf16.mxu0 0
        %1060 = vmatpush1.bf16.xpose.msra.mxu0 0
        %1061 = vmatprep.subr.bf16.mxu0 0
        %1062 = vmatpush1.bf16.xpose.msra.mxu0 0
        %1063 = vmatprep.subr.bf16.mxu0 0
        %1064 = vmatpush1.bf16.xpose.msra.mxu0 0
        %1065 = vmatprep.subr.bf16.mxu0 0
        %1066 = vmatpush1.bf16.xpose.msra.mxu0 0
        %1067 = vmatprep.subr.bf16.mxu0 0
        %1068 = vmatpush1.bf16.xpose.msra.mxu0 0
        %1069 = vmatprep.subr.bf16.mxu0 0
        %1070 = vmatpush1.bf16.xpose.msra.mxu0 0
        %1071 = vmatprep.subr.bf16.mxu0 0
        %1072 = vmatpush1.bf16.xpose.msra.mxu0 0
        %1073 = vmatprep.mubr.bf16.mxu0 0
        %1074 = vmatmul.mubr.bf16.gmra.mrb[0].mxu0 %v1036
        %v1075 = vpop.f32.mrb[0].mxu0
        %v1076 = vadd.f32 0.0, %v1075
        %v1077 = vpop.f32.mrb[0].mxu0
        %v1078 = vpop.f32.mrb[0].mxu0
        %v1079 = vpop.f32.mrb[0].mxu0
        %1080 = vdwg.mxu0
        %v1081 = vsel %vm685, %v1076, -inf
        %1082 = vmax.xlane.f32.xlu0 %v1081
        %v1083 = vpop.xlane.xlu0 %1082
        %v1084 = vsub.f32 %v1076, %v1083
        %v1085 = vmul.f32 %v1084, 1.442695
        %v1086 = vpow.pop %v1085
        %v1087 = vsel %vm685, %v1086, 0.0
        %1088 = vadd.xlane.f32.xlu0 %v1087
        %v1089 = vpop.xlane.xlu0 %1088
        %v1090 = vpack.c.bf16 %v1086, %v1086
        %1091 = vrot.lane.b32.xlu0 %v858, 104
        %v1092 = vpop.permute.xlu0 %1091
        %v1094 = vsel %vm685, %v1090, 0
        %v1097 = vsel %vm745, %v1092, 0
        %1099 = vmatprep.subr.bf16.mxu0 0
        %1100 = vmatpush1.bf16.msra.mxu0 %v1097
        %1101 = vmatprep.subr.bf16.mxu0 0
        %1102 = vmatpush1.bf16.msra.mxu0 0
        %1103 = vmatprep.subr.bf16.mxu0 0
        %1104 = vmatpush1.bf16.msra.mxu0 0
        %1105 = vmatprep.subr.bf16.mxu0 0
        %1106 = vmatpush1.bf16.msra.mxu0 0
        %1107 = vmatprep.subr.bf16.mxu0 0
        %1108 = vmatpush1.bf16.msra.mxu0 0
        %1109 = vmatprep.subr.bf16.mxu0 0
        %1110 = vmatpush1.bf16.msra.mxu0 0
        %1111 = vmatprep.subr.bf16.mxu0 0
        %1112 = vmatpush1.bf16.msra.mxu0 0
        %1113 = vmatprep.subr.bf16.mxu0 0
        %1114 = vmatpush1.bf16.msra.mxu0 0
        %1115 = vmatprep.subr.bf16.mxu0 0
        %1116 = vmatpush1.bf16.msra.mxu0 0
        %1117 = vmatprep.subr.bf16.mxu0 0
        %1118 = vmatpush1.bf16.msra.mxu0 0
        %1119 = vmatprep.subr.bf16.mxu0 0
        %1120 = vmatpush1.bf16.msra.mxu0 0
        %1121 = vmatprep.subr.bf16.mxu0 0
        %1122 = vmatpush1.bf16.msra.mxu0 0
        %1123 = vmatprep.subr.bf16.mxu0 0
        %1124 = vmatpush1.bf16.msra.mxu0 0
        %1125 = vmatprep.subr.bf16.mxu0 0
        %1126 = vmatpush1.bf16.msra.mxu0 0
        %1127 = vmatprep.subr.bf16.mxu0 0
        %1128 = vmatpush1.bf16.msra.mxu0 0
        %1129 = vmatprep.subr.bf16.mxu0 0
        %1130 = vmatpush1.bf16.msra.mxu0 0
        %1131 = vmatprep.mubr.bf16.mxu0 0
        %1132 = vmatmul.mubr.bf16.gmra.mrb[0].mxu0 %v1094
        %v1133 = vpop.f32.mrb[0].mxu0
        %v1134 = vadd.f32 0.0, %v1133
        %v1135 = vpop.f32.mrb[0].mxu0
        %v1136 = vpop.f32.mrb[0].mxu0
        %v1137 = vpop.f32.mrb[0].mxu0
        %1138 = vdwg.mxu0
        %v1139 = vrcp.pop %v1089
        %v1140 = vmul.f32 %v1134, %v1139
        %1142 = vrot.lane.b32.xlu0 %v1140, 24
        %v1143 = vpop.permute.xlu0 %1142
        %vm1145 = vcmask 261312
        %1146 = vst.msk [vmem:[#allocation4] sm:$0xff] %vm1145, %v1143
        %v1147 = vld [vmem:[#allocation4] sm:$0xff]
        %v1148 = vpack.c.bf16 %v1147, %v1147
        %v1149 = vld [vmem:[%s4] sm:$0xf]
        %v1150 = vld [vmem:[%s4 + $0x4] sm:$0xf]
        %v1151 = vld [vmem:[%s4 + $0x8] sm:$0xf]
        %v1152 = vld [vmem:[%s4 + $0xc] sm:$0xf]
        %v1153 = vld [vmem:[%s5] sm:$0x1]
        %v1155 = vlaneseq
        %v1156 = vshrl.u32 %v1155, 7
        %v1157 = vsub.s32 0, %v1156
        %v1158 = vrot.slane %v1153, %v1157
        %v1164 = vunpack.c.l.b16 %v1149
        %v1165 = vunpack.c.l.b16 %v1150
        %v1166 = vunpack.c.l.b16 %v1151
        %v1167 = vunpack.c.l.b16 %v1152
        %v1168 = vpack.c.b16 %v1165, %v1164
        %v1169 = vpack.c.b16 %v1167, %v1166
        %v1173 = vsel %vm638, %v1148, 0
        %1175 = vmatprep.subr.bf16.mxu0 0
        %1176 = vmatpush1.bf16.msra.mxu0 %v1168
        %1177 = vmatprep.subr.bf16.mxu0 0
        %1178 = vmatpush1.bf16.msra.mxu0 %v1169
        %1179 = vmatprep.subr.bf16.mxu0 0
        %1180 = vmatpush1.bf16.msra.mxu0 0
        %1181 = vmatprep.subr.bf16.mxu0 0
        %1182 = vmatpush1.bf16.msra.mxu0 0
        %1183 = vmatprep.subr.bf16.mxu0 0
        %1184 = vmatpush1.bf16.msra.mxu0 0
        %1185 = vmatprep.subr.bf16.mxu0 0
        %1186 = vmatpush1.bf16.msra.mxu0 0
        %1187 = vmatprep.subr.bf16.mxu0 0
        %1188 = vmatpush1.bf16.msra.mxu0 0
        %1189 = vmatprep.subr.bf16.mxu0 0
        %1190 = vmatpush1.bf16.msra.mxu0 0
        %1191 = vmatprep.subr.bf16.mxu0 0
        %1192 = vmatpush1.bf16.msra.mxu0 0
        %1193 = vmatprep.subr.bf16.mxu0 0
        %1194 = vmatpush1.bf16.msra.mxu0 0
        %1195 = vmatprep.subr.bf16.mxu0 0
        %1196 = vmatpush1.bf16.msra.mxu0 0
        %1197 = vmatprep.subr.bf16.mxu0 0
        %1198 = vmatpush1.bf16.msra.mxu0 0
        %1199 = vmatprep.subr.bf16.mxu0 0
        %1200 = vmatpush1.bf16.msra.mxu0 0
        %1201 = vmatprep.subr.bf16.mxu0 0
        %1202 = vmatpush1.bf16.msra.mxu0 0
        %1203 = vmatprep.subr.bf16.mxu0 0
        %1204 = vmatpush1.bf16.msra.mxu0 0
        %1205 = vmatprep.subr.bf16.mxu0 0
        %1206 = vmatpush1.bf16.msra.mxu0 0
        %1207 = vmatprep.mubr.bf16.mxu0 0
        %1208 = vmatmul.mubr.bf16.gmra.mrb[0].mxu0 %v1173
        %v1209 = vpop.f32.mrb[0].mxu0
        %v1210 = vadd.f32 %v1158, %v1209
        %v1211 = vpop.f32.mrb[0].mxu0
        %v1212 = vpop.f32.mrb[0].mxu0
        %v1213 = vpop.f32.mrb[0].mxu0
        %1214 = vdwg.mxu0
        %v1215 = vld [vmem:[%s6] sm:$0x1]
        %v1216 = vld [vmem:[%s7] sm:$0x1]
        %v1217 = vsel %vm638, %v620, 0.0
        %1218 = vadd.xlane.f32.xlu0 %v1217
        %v1219 = vpop.xlane.xlu0 %1218
        %v1220 = vrcp.pop 32.0
        %v1221 = vmul.f32 %v1219, %v1220
        %v1222 = vsub.f32 %v620, %v1221
        %v1223 = vmul.f32 %v1222, %v1222
        %v1224 = vsel %vm638, %v1223, 0.0
        %1225 = vadd.xlane.f32.xlu0 %v1224
        %v1226 = vpop.xlane.xlu0 %1225
        %v1227 = vmul.f32 %v1226, %v1220
        %v1228 = vadd.f32 %v1227, 1e-05
        %v1229 = vrsqrt.pop %v1228
        %v1230 = vmul.f32 %v1222, %v1229
        %v1232 = vlaneseq
        %v1233 = vshrl.u32 %v1232, 7
        %v1234 = vsub.s32 0, %v1233
        %v1235 = vrot.slane %v1215, %v1234
        %v1237 = vmul.f32 %v1230, %v1235
        %v1239 = vlaneseq
        %v1240 = vshrl.u32 %v1239, 7
        %v1241 = vsub.s32 0, %v1240
        %v1242 = vrot.slane %v1216, %v1241
        %v1244 = vadd.f32 %v1237, %v1242
        %v1245 = vadd.f32 %v1244, %v1210
        %v1246 = vpack.c.bf16 %v1245, %v1245
        %v1247 = vld [vmem:[#allocation5] sm:$0xf]
        %v1248 = vld [vmem:[#allocation5 + $0x4] sm:$0xf]
        %v1249 = vld [vmem:[#allocation5 + $0x8] sm:$0xf]
        %v1250 = vld [vmem:[#allocation5 + $0xc] sm:$0xf]
        %v1251 = vld [vmem:[%s9] sm:$0x1]
        %v1253 = vlaneseq
        %v1254 = vshrl.u32 %v1253, 7
        %v1255 = vsub.s32 0, %v1254
        %v1256 = vrot.slane %v1251, %v1255
        %v1262 = vunpack.c.l.b16 %v1247
        %v1263 = vunpack.c.l.b16 %v1248
        %v1264 = vunpack.c.l.b16 %v1249
        %v1265 = vunpack.c.l.b16 %v1250
        %v1266 = vpack.c.b16 %v1263, %v1262
        %v1267 = vpack.c.b16 %v1265, %v1264
        %v1271 = vsel %vm638, %v1246, 0
        %1273 = vmatprep.subr.bf16.mxu0 0
        %1274 = vmatpush1.bf16.msra.mxu0 %v1266
        %1275 = vmatprep.subr.bf16.mxu0 0
        %1276 = vmatpush1.bf16.msra.mxu0 %v1267
        %1277 = vmatprep.subr.bf16.mxu0 0
        %1278 = vmatpush1.bf16.msra.mxu0 0
        %1279 = vmatprep.subr.bf16.mxu0 0
        %1280 = vmatpush1.bf16.msra.mxu0 0
        %1281 = vmatprep.subr.bf16.mxu0 0
        %1282 = vmatpush1.bf16.msra.mxu0 0
        %1283 = vmatprep.subr.bf16.mxu0 0
        %1284 = vmatpush1.bf16.msra.mxu0 0
        %1285 = vmatprep.subr.bf16.mxu0 0
        %1286 = vmatpush1.bf16.msra.mxu0 0
        %1287 = vmatprep.subr.bf16.mxu0 0
        %1288 = vmatpush1.bf16.msra.mxu0 0
        %1289 = vmatprep.subr.bf16.mxu0 0
        %1290 = vmatpush1.bf16.msra.mxu0 0
        %1291 = vmatprep.subr.bf16.mxu0 0
        %1292 = vmatpush1.bf16.msra.mxu0 0
        %1293 = vmatprep.subr.bf16.mxu0 0
        %1294 = vmatpush1.bf16.msra.mxu0 0
        %1295 = vmatprep.subr.bf16.mxu0 0
        %1296 = vmatpush1.bf16.msra.mxu0 0
        %1297 = vmatprep.subr.bf16.mxu0 0
        %1298 = vmatpush1.bf16.msra.mxu0 0
        %1299 = vmatprep.subr.bf16.mxu0 0
        %1300 = vmatpush1.bf16.msra.mxu0 0
        %1301 = vmatprep.subr.bf16.mxu0 0
        %1302 = vmatpush1.bf16.msra.mxu0 0
        %1303 = vmatprep.subr.bf16.mxu0 0
        %1304 = vmatpush1.bf16.msra.mxu0 0
        %1305 = vmatprep.mubr.bf16.mxu0 0
        %1306 = vmatmul.mubr.bf16.gmra.mrb[0].mxu0 %v1271
        %v1307 = vpop.f32.mrb[0].mxu0
        %v1308 = vadd.f32 %v1256, %v1307
        %v1309 = vpop.f32.mrb[0].mxu0
        %v1310 = vpop.f32.mrb[0].mxu0
        %v1311 = vpop.f32.mrb[0].mxu0
        %1312 = vdwg.mxu0
        %v1313 = vmax.f32 %v1308, 0.0
        %v1314 = vpack.c.bf16 %v1313, %v1313
        %v1315 = vld [vmem:[%s10] sm:$0xf]
        %v1316 = vld [vmem:[%s10 + $0x4] sm:$0xf]
        %v1317 = vld [vmem:[%s10 + $0x8] sm:$0xf]
        %v1318 = vld [vmem:[%s10 + $0xc] sm:$0xf]
        %v1319 = vld [vmem:[%s10 + $0x10] sm:$0xf]
        %v1320 = vld [vmem:[%s10 + $0x14] sm:$0xf]
        %v1321 = vld [vmem:[%s10 + $0x18] sm:$0xf]
        %v1322 = vld [vmem:[%s10 + $0x1c] sm:$0xf]
        %v1323 = vld [vmem:[%s10 + $0x20] sm:$0xf]
        %v1324 = vld [vmem:[%s10 + $0x24] sm:$0xf]
        %v1325 = vld [vmem:[%s10 + $0x28] sm:$0xf]
        %v1326 = vld [vmem:[%s10 + $0x2c] sm:$0xf]
        %v1327 = vld [vmem:[%s10 + $0x30] sm:$0xf]
        %v1328 = vld [vmem:[%s10 + $0x34] sm:$0xf]
        %v1329 = vld [vmem:[%s10 + $0x38] sm:$0xf]
        %v1330 = vld [vmem:[%s10 + $0x3c] sm:$0xf]
        %v1331 = vld [vmem:[%s11] sm:$0x1]
        %v1333 = vlaneseq
        %v1334 = vshrl.u32 %v1333, 7
        %v1335 = vsub.s32 0, %v1334
        %v1336 = vrot.slane %v1331, %v1335
        %v1354 = vunpack.c.l.b16 %v1315
        %v1355 = vunpack.c.l.b16 %v1316
        %v1356 = vunpack.c.l.b16 %v1317
        %v1357 = vunpack.c.l.b16 %v1318
        %v1358 = vunpack.c.l.b16 %v1319
        %v1359 = vunpack.c.l.b16 %v1320
        %v1360 = vunpack.c.l.b16 %v1321
        %v1361 = vunpack.c.l.b16 %v1322
        %v1362 = vunpack.c.l.b16 %v1323
        %v1363 = vunpack.c.l.b16 %v1324
        %v1364 = vunpack.c.l.b16 %v1325
        %v1365 = vunpack.c.l.b16 %v1326
        %v1366 = vunpack.c.l.b16 %v1327
        %v1367 = vunpack.c.l.b16 %v1328
        %v1368 = vunpack.c.l.b16 %v1329
        %v1369 = vunpack.c.l.b16 %v1330
        %v1370 = vpack.c.b16 %v1355, %v1354
        %v1371 = vpack.c.b16 %v1357, %v1356
        %v1372 = vpack.c.b16 %v1359, %v1358
        %v1373 = vpack.c.b16 %v1361, %v1360
        %v1374 = vpack.c.b16 %v1363, %v1362
        %v1375 = vpack.c.b16 %v1365, %v1364
        %v1376 = vpack.c.b16 %v1367, %v1366
        %v1377 = vpack.c.b16 %v1369, %v1368
        %1386 = vmatprep.subr.bf16.mxu0 0
        %1387 = vmatpush1.bf16.msra.mxu0 %v1370
        %1388 = vmatprep.subr.bf16.mxu0 0
        %1389 = vmatpush1.bf16.msra.mxu0 %v1371
        %1390 = vmatprep.subr.bf16.mxu0 0
        %1391 = vmatpush1.bf16.msra.mxu0 %v1372
        %1392 = vmatprep.subr.bf16.mxu0 0
        %1393 = vmatpush1.bf16.msra.mxu0 %v1373
        %1394 = vmatprep.subr.bf16.mxu0 0
        %1395 = vmatpush1.bf16.msra.mxu0 %v1374
        %1396 = vmatprep.subr.bf16.mxu0 0
        %1397 = vmatpush1.bf16.msra.mxu0 %v1375
        %1398 = vmatprep.subr.bf16.mxu0 0
        %1399 = vmatpush1.bf16.msra.mxu0 %v1376
        %1400 = vmatprep.subr.bf16.mxu0 0
        %1401 = vmatpush1.bf16.msra.mxu0 %v1377
        %1402 = vmatprep.subr.bf16.mxu0 0
        %1403 = vmatpush1.bf16.msra.mxu0 0
        %1404 = vmatprep.subr.bf16.mxu0 0
        %1405 = vmatpush1.bf16.msra.mxu0 0
        %1406 = vmatprep.subr.bf16.mxu0 0
        %1407 = vmatpush1.bf16.msra.mxu0 0
        %1408 = vmatprep.subr.bf16.mxu0 0
        %1409 = vmatpush1.bf16.msra.mxu0 0
        %1410 = vmatprep.subr.bf16.mxu0 0
        %1411 = vmatpush1.bf16.msra.mxu0 0
        %1412 = vmatprep.subr.bf16.mxu0 0
        %1413 = vmatpush1.bf16.msra.mxu0 0
        %1414 = vmatprep.subr.bf16.mxu0 0
        %1415 = vmatpush1.bf16.msra.mxu0 0
        %1416 = vmatprep.subr.bf16.mxu0 0
        %1417 = vmatpush1.bf16.msra.mxu0 0
        %1418 = vmatprep.mubr.bf16.mxu0 0
        %1419 = vmatmul.mubr.bf16.gmra.mrb[0].mxu0 %v1314
        %v1420 = vpop.f32.mrb[0].mxu0
        %v1421 = vadd.f32 %v1336, %v1420
        %v1422 = vpop.f32.mrb[0].mxu0
        %v1423 = vpop.f32.mrb[0].mxu0
        %v1424 = vpop.f32.mrb[0].mxu0
        %1425 = vdwg.mxu0
        %v1426 = vadd.f32 %v1421, %v1245
        %v1427 = vld [vmem:[%s12] sm:$0x1]
        %v1428 = vld [vmem:[%s13] sm:$0x1]
        %v1429 = vsel %vm638, %v1426, 0.0
        %1430 = vadd.xlane.f32.xlu0 %v1429
        %v1431 = vpop.xlane.xlu0 %1430
        %v1432 = vmul.f32 %v1431, %v1220
        %v1433 = vsub.f32 %v1426, %v1432
        %v1434 = vmul.f32 %v1433, %v1433
        %v1435 = vsel %vm638, %v1434, 0.0
        %1436 = vadd.xlane.f32.xlu0 %v1435
        %v1437 = vpop.xlane.xlu0 %1436
        %v1438 = vmul.f32 %v1437, %v1220
        %v1439 = vadd.f32 %v1438, 1e-05
        %v1440 = vrsqrt.pop %v1439
        %v1441 = vmul.f32 %v1433, %v1440
        %v1443 = vlaneseq
        %v1444 = vshrl.u32 %v1443, 7
        %v1445 = vsub.s32 0, %v1444
        %v1446 = vrot.slane %v1427, %v1445
        %v1448 = vmul.f32 %v1441, %v1446
        %v1450 = vlaneseq
        %v1451 = vshrl.u32 %v1450, 7
        %v1452 = vsub.s32 0, %v1451
        %v1453 = vrot.slane %v1428, %v1452
        %v1455 = vadd.f32 %v1448, %v1453
        %1456 = vst.msk [vmem:[%s487] sm:$0xff] %vm638, %v1455
        %s1457 = sand.u32 %s350, 1
        %s1458 = scalar_lea.sflag [#allocation7], %s1457
        %s1459 = sand.u32 %s350, 1
        %s1460 = smul.addr %s1459, 8
        %s1461 = scalar_lea.vmem [#allocation8], %s1460
        // Predicated region
        $region85: #{tpu_custom_call.1} parent=75 // pred_check
          %p1462 = pneg %p360
        $region86: #{tpu_custom_call.1} parent=75 // pred_check_branch
          %1464 = sbr.rel (%p1462) target = $region88
        $region87: #{tpu_custom_call.1} parent=75 // pred_region
          %s1466 = ssub.s32 128, 128
          %1467 = vsyncadd %s1458, %s1466
          %s1468 = sadd.s32 %s34, %s33
          %s1469 = smul.addr %s1468, 128
          %s1470 = scalar_lea.hbm %s14, %s1469
          %s1472 = sshll.u32 %s1461, 4
          %s1473 = int_to_ptr.vmem [resolvable:$true] %s1472
          %1475 = dma.vmem_to_hbm [thread:$0]  %s1473, 128, %s1470, %s1458
        $region88: #{tpu_custom_call.1} parent=75 // pred_fallthru
          _
      $region76: #{tpu_custom_call.1} parent=5 // pred_fallthru
        _
      %p1476 = scmp.le.s32.totalorder 2, %s24
      // Predicated region
      $region89: #{tpu_custom_call.1} parent=5 // pred_check
        %p1477 = pneg %p1476
      $region90: #{tpu_custom_call.1} parent=5 // pred_check_branch
        %1479 = sbr.rel (%p1477) target = $region92
      $region91: #{tpu_custom_call.1} parent=5 // pred_region
        %s1480 = ssub.s32 %s24, 2
        // Predicated region
        $region93: #{tpu_custom_call.1} parent=91 // pred_check
          %p1481 = pneg %p366
        $region94: #{tpu_custom_call.1} parent=91 // pred_check_branch
          %1483 = sbr.rel (%p1481) target = $region96
        $region95: #{tpu_custom_call.1} parent=91 // pred_region
          %s1484 = sand.u32 %s351, 1
          %s1485 = scalar_lea.sflag [#allocation7], %s1484
          %s1486 = sand.u32 %s351, 1
          %s1487 = smul.addr %s1486, 8
          %s1488 = scalar_lea.vmem [#allocation8], %s1487
          %1489 = dma.done %s1485, 128
        $region96: #{tpu_custom_call.1} parent=91 // pred_fallthru
          _
      $region92: #{tpu_custom_call.1} parent=5 // pred_fallthru
        _
    $region6: #{tpu_custom_call.1} parent=1 // loop_footer
      %s28 = sadd.s32 1, %s24
    $region7: #{tpu_custom_call.1} parent=1 // loop_footer_branch
      %23 = sbr.rel target = $region3
    $region8: #{tpu_custom_call.1} parent=1 // loop_exit
      _
    %1490 = vsyncpa [#allocation6], 1
    %s1491 = scalar_lea.sflag [#allocation6], 1
    %1492 = vsyncpa %s1491, 1
    %1493 = vsyncpa [#allocation7], 1
    %s1494 = scalar_lea.sflag [#allocation7], 1
    %1495 = vsyncpa %s1494, 1

</llo_original>
